<compile_context>
chip_gen: v7x
topology: tpu7x:2x2x1
jax: 0.10.0
libtpu: 0.0.40
codegen_flags: <defaults>
</compile_context>

<pallas_src>
import functools

import jax
import jax.numpy as jnp
from jax import lax
from jax.experimental import pallas as pl
from jax.experimental.pallas import tpu as pltpu


def _round_up(x, m):
    return (x + m - 1) // m * m


# ------------------------------ fused kernel --------------------------------

def _fused_fe_kernel(x_ref, sel_ref, *rest, meta):
    """Both branches of PrecFeatureExtractor in one kernel invocation.

    rest = (wL0, bL0, wL1, bL1, ..., wR0, bR0, ..., out_ref, buf_ref, col_ref)

    Activations are (C_pad, B*L_cur) f32 values.  `buf_ref` is a zeroed VMEM
    staging row used to realize the 'same' padding + lane shifts for the conv
    taps and the +1 shift of the max-pool; `col_ref` holds the im2col tile.
    """
    out_ref, buf_ref, col_ref = rest[-3], rest[-2], rest[-1]
    wb_refs = rest[:-3]

    batch = meta["batch"]
    length = meta["length"]
    sel = sel_ref[...]                                  # (B*L, B*L//2) bf16
    x0 = x_ref[...]                                     # (C_in_pad, B*L) f32

    wb_i = 0
    out_off = 0
    for br in meta["branches"]:
        ksize, dil, pad = br["kernel_size"], br["dilation"], br["pad"]
        y = x0
        l_cur = length
        l_tot = batch * length

        for li, lay in enumerate(br["layers"]):
            c_in_p = lay["c_in_pad"]
            c_out_p = lay["c_out_pad"]
            w = wb_refs[wb_i][...]                      # (C_out_pad, K*C_in_pad) bf16
            b = wb_refs[wb_i + 1][...]                  # (C_out_pad, 1) f32
            wb_i += 2

            # 'same' padding done in VMEM: stage y at lane offset `pad` inside
            # a zeroed scratch so every tap is a plain static lane slice.
            buf_ref[...] = jnp.zeros(buf_ref.shape, buf_ref.dtype)
            buf_ref[0:c_in_p, pad:pad + l_tot] = y

            # Build the im2col tile (K*C_in_pad, B*l_cur) in VMEM.  Lanes whose
            # tap would cross a batch-element boundary are masked to zero
            # (this is exactly the per-element zero padding of the conv).
            pos = lax.broadcasted_iota(jnp.int32, (1, l_tot), 1) % l_cur
            for k in range(ksize):
                d = k * dil - pad                       # lane offset of tap k
                tap = buf_ref[0:c_in_p, k * dil:k * dil + l_tot]
                ok = jnp.logical_and(pos + d >= 0,
                                     pos + d < l_cur).astype(jnp.float32)
                col_ref[k * c_in_p:(k + 1) * c_in_p, 0:l_tot] = tap * ok
            im2col = col_ref[0:ksize * c_in_p, 0:l_tot].astype(jnp.bfloat16)

            # One MXU matmul per conv layer (bf16 inputs, f32 accumulation).
            acc = jnp.dot(w, im2col, preferred_element_type=jnp.float32) + b

            if li == 0:
                # MaxPool1d(2): pair max via a shift-by-one view + maximum,
                # then decimate even lanes with ONE small 0/1 selection matmul
                # (selection matrix is a VMEM-resident kernel input).
                buf_ref[...] = jnp.zeros(buf_ref.shape, buf_ref.dtype)
                buf_ref[0:c_out_p, 0:l_tot] = acc
                pm = jnp.maximum(acc, buf_ref[0:c_out_p, 1:l_tot + 1])
                acc = jnp.dot(pm.astype(jnp.bfloat16), sel,
                              preferred_element_type=jnp.float32)
                l_cur //= 2
                l_tot //= 2

            y = acc                                     # f32 carried activation

        c_fin_p = br["layers"][-1]["c_out_pad"]
        out_ref[out_off:out_off + c_fin_p, :] = y.astype(out_ref.dtype)
        out_off += c_fin_p


# ------------------------------ host wrapper ---------------------------------

def _prep_branch(params, dilation, c_in, c_in_pad):
    """Pack a branch's Conv1d params: (C_out_pad, K*C_in_pad) bf16 weights."""
    ksize = params[0][0].shape[2]
    if dilation * (ksize - 1) % 2 != 0:
        # Same check as PrecFeatureExtractor.__init__.
        raise ValueError("Please re-input dilation, kernel_size!!!")
    pad = dilation * (ksize - 1) // 2
    layers, flat = [], []
    cin, cin_p = c_in, c_in_pad
    for (w, b) in params:
        c_out, c_in_w, k = w.shape
        assert c_in_w == cin and k == ksize
        c_out_p = _round_up(c_out, 8)
        w3 = jnp.zeros((c_out_p, ksize, cin_p), jnp.float32)
        w3 = w3.at[:c_out, :, :cin].set(
            jnp.transpose(w.astype(jnp.float32), (0, 2, 1)))   # (Cout, K, Cin)
        flat.append(w3.reshape(c_out_p, ksize * cin_p).astype(jnp.bfloat16))
        flat.append(jnp.zeros((c_out_p, 1), jnp.float32)
                    .at[:c_out, 0].set(b.astype(jnp.float32)))
        layers.append({"c_in_pad": cin_p, "c_out_pad": c_out_p, "c_out": c_out})
        cin, cin_p = c_out, c_out_p
    meta = {"kernel_size": ksize, "dilation": dilation, "pad": pad,
            "layers": layers}
    return meta, flat


@functools.partial(jax.jit, static_argnames=("left_dilation", "right_dilation"))
def prec_feature_extractor(x, left_params, right_params, *,
                           left_dilation=1, right_dilation=1):
    """Eval-mode forward of PrecFeatureExtractor (cnn_name='conv1d')."""
    B, c_in, L = x.shape
    if L % 2 != 0:
        raise ValueError("sequence length must be even for MaxPool1d(2)")
    c_in_pad = _round_up(c_in, 8)

    # Pack batch into the lane axis: (C_in_pad, B*L) f32.
    xp = jnp.transpose(x.astype(jnp.float32), (1, 0, 2)).reshape(c_in, B * L)
    xp = jnp.pad(xp, ((0, c_in_pad - c_in), (0, 0)))

    l_tot, l_half = B * L, (B * L) // 2
    # 0/1 even-lane decimation matrix for MaxPool1d(2), VMEM-resident, bf16.
    sel = (jnp.arange(l_tot)[:, None] ==
           2 * jnp.arange(l_half)[None, :]).astype(jnp.bfloat16)

    left_meta, left_in = _prep_branch(left_params, left_dilation,
                                      c_in, c_in_pad)
    right_meta, right_in = _prep_branch(right_params, right_dilation,
                                        c_in, c_in_pad)
    meta = {"batch": B, "length": L, "branches": (left_meta, right_meta)}

    # Scratch sizing + advisory cost estimate.
    c_buf, w_need, kc_buf, flops = c_in_pad, 1, 8, 0
    for bm in (left_meta, right_meta):
        lt = l_tot
        for li, lay in enumerate(bm["layers"]):
            c_buf = max(c_buf, lay["c_out_pad"])
            kc_buf = max(kc_buf, bm["kernel_size"] * lay["c_in_pad"])
            w_need = max(w_need, lt + 2 * bm["pad"])
            flops += 2 * lay["c_out_pad"] * bm["kernel_size"] * lay["c_in_pad"] * lt
            if li == 0:
                w_need = max(w_need, lt + 1)
                flops += 2 * lay["c_out_pad"] * lt * (lt // 2)
                lt //= 2
    w_buf = _round_up(w_need, 128)
    col_w = _round_up(l_tot, 128)

    c_lp = left_meta["layers"][-1]["c_out_pad"]
    c_l = left_meta["layers"][-1]["c_out"]
    c_rp = right_meta["layers"][-1]["c_out_pad"]
    c_r = right_meta["layers"][-1]["c_out"]
    out_rows = c_lp + c_rp

    inputs = [xp, sel] + left_in + right_in
    bytes_accessed = int(sum(a.size * a.dtype.itemsize for a in inputs)
                         + out_rows * l_half * 4)

    out2d = pl.pallas_call(
        functools.partial(_fused_fe_kernel, meta=meta),
        out_shape=jax.ShapeDtypeStruct((out_rows, l_half), jnp.float32),
        grid=(1,),
        in_specs=[pl.BlockSpec(a.shape, lambda i: (0, 0)) for a in inputs],
        out_specs=pl.BlockSpec((out_rows, l_half), lambda i: (0, 0)),
        scratch_shapes=[pltpu.VMEM((c_buf, w_buf), jnp.float32),
                        pltpu.VMEM((kc_buf, col_w), jnp.float32)],
        compiler_params=pltpu.CompilerParams(
            dimension_semantics=("arbitrary",)),
        cost_estimate=pl.CostEstimate(flops=flops, transcendentals=0,
                                      bytes_accessed=bytes_accessed),
    )(*inputs)

    # Valid channels of each branch; (C, B*L/2) -> (B, C, L/2).
    feats = jnp.concatenate([out2d[:c_l], out2d[c_lp:c_lp + c_r]], axis=0)
    feats = feats.reshape(c_l + c_r, B, L // 2)
    return jnp.transpose(feats, (1, 0, 2)).astype(x.dtype)


# ------------------------------ parameter init -------------------------------

def init_branch(key, c_in, hidden_channels, kernel_size):
    """Deterministic Conv1d params (PyTorch-style uniform fan-in init)."""
    params = []
    chans = [c_in] + list(hidden_channels)
    for i in range(len(hidden_channels)):
        key, kw, kb = jax.random.split(key, 3)
        fan_in = chans[i] * kernel_size
        bound = 1.0 / (fan_in ** 0.5)
        w = jax.random.uniform(kw, (chans[i + 1], chans[i], kernel_size),
                               jnp.float32, -bound, bound)
        bias = jax.random.uniform(kb, (chans[i + 1],), jnp.float32,
                                  -bound, bound)
        params.append((w, bias))
    return params


# -------------------------------- reference ----------------------------------

def _ref_conv1d_block(x, w, b, dilation, maxpool):
    K = w.shape[2]
    pad = dilation * (K - 1) // 2
    y = lax.conv_general_dilated(
        x, w, window_strides=(1,), padding=[(pad, pad)],
        rhs_dilation=(dilation,), dimension_numbers=("NCH", "OIH", "NCH"))
    y = y + b[None, :, None]
    if maxpool:
        B, C, L = y.shape
        y = jnp.max(y[:, :, :(L // 2) * 2].reshape(B, C, L // 2, 2), axis=-1)
    return y


def _ref_forward(x, left_params, right_params, left_dil, right_dil):
    f1, f2 = x, x
    for i, (w, b) in enumerate(left_params):
        f1 = _ref_conv1d_block(f1, w, b, left_dil, maxpool=(i == 0))
    for i, (w, b) in enumerate(right_params):
        f2 = _ref_conv1d_block(f2, w, b, right_dil, maxpool=(i == 0))
    return jnp.concatenate([f1, f2], axis=1)


# ----------------------------------- main -------------------------------------

if __name__ == "__main__":
    key = jax.random.PRNGKey(0)
    B, C_in, L = 2, 4, 16
    left_hidden_channels = [8, 16]
    right_hidden_channels = [8, 16]
    left_fe_kernel_size, right_fe_kernel_size = 3, 5
    left_fe_dilation, right_fe_dilation = 1, 1

    key, kx, kl, kr = jax.random.split(key, 4)
    x = jax.random.normal(kx, (B, C_in, L), jnp.float32)
    left_params = init_branch(kl, C_in, left_hidden_channels,
                              left_fe_kernel_size)
    right_params = init_branch(kr, C_in, right_hidden_channels,
                               right_fe_kernel_size)

    out = prec_feature_extractor(x, left_params, right_params,
                                 left_dilation=left_fe_dilation,
                                 right_dilation=right_fe_dilation)
    out = jax.block_until_ready(out)

    ref = jax.block_until_ready(
        _ref_forward(x, left_params, right_params,
                     left_fe_dilation, right_fe_dilation))

    expected_shape = (B,
                      left_hidden_channels[-1] + right_hidden_channels[-1],
                      L // 2)
    assert out.shape == expected_shape, (out.shape, expected_shape)
    # bf16 MXU inputs with f32 accumulation vs. an f32 reference.
    max_err = float(jnp.max(jnp.abs(out - ref)))
    assert max_err < 5e-2, max_err
    print("KERNEL_OK")
</pallas_src>

<mosaic_0001>
module attributes {stable_mosaic.version = 11 : i64} {
  func.func @_fused_fe_kernel(%arg0: i32, %arg1: memref<8x32xf32, #tpu.memory_space<vmem>>, %arg2: memref<32x16xbf16, #tpu.memory_space<vmem>>, %arg3: memref<8x24xbf16, #tpu.memory_space<vmem>>, %arg4: memref<8x1xf32, #tpu.memory_space<vmem>>, %arg5: memref<16x24xbf16, #tpu.memory_space<vmem>>, %arg6: memref<16x1xf32, #tpu.memory_space<vmem>>, %arg7: memref<8x40xbf16, #tpu.memory_space<vmem>>, %arg8: memref<8x1xf32, #tpu.memory_space<vmem>>, %arg9: memref<16x40xbf16, #tpu.memory_space<vmem>>, %arg10: memref<16x1xf32, #tpu.memory_space<vmem>>, %arg11: memref<32x16xf32, #tpu.memory_space<vmem>>, %arg12: memref<16x128xf32, #tpu.memory_space<vmem>>, %arg13: memref<40x128xf32, #tpu.memory_space<vmem>>) attributes {dimension_semantics = [#tpu.dimension_semantics<arbitrary>], iteration_bounds = array<i64: 1>, scalar_prefetch = 0 : i64, scratch_operands = 2 : i64, tpu.core_type = #tpu.core_type<tc>, window_params = [{pipeline_mode = #tpu.pipeline_mode<synchronous>, transform_indices = @transform_0, window_bounds = array<i64: 8, 32>}, {pipeline_mode = #tpu.pipeline_mode<synchronous>, transform_indices = @transform_1, window_bounds = array<i64: 32, 16>}, {pipeline_mode = #tpu.pipeline_mode<synchronous>, transform_indices = @transform_2, window_bounds = array<i64: 8, 24>}, {pipeline_mode = #tpu.pipeline_mode<synchronous>, transform_indices = @transform_3, window_bounds = array<i64: 8, 1>}, {pipeline_mode = #tpu.pipeline_mode<synchronous>, transform_indices = @transform_4, window_bounds = array<i64: 16, 24>}, {pipeline_mode = #tpu.pipeline_mode<synchronous>, transform_indices = @transform_5, window_bounds = array<i64: 16, 1>}, {pipeline_mode = #tpu.pipeline_mode<synchronous>, transform_indices = @transform_6, window_bounds = array<i64: 8, 40>}, {pipeline_mode = #tpu.pipeline_mode<synchronous>, transform_indices = @transform_7, window_bounds = array<i64: 8, 1>}, {pipeline_mode = #tpu.pipeline_mode<synchronous>, transform_indices = @transform_8, window_bounds = array<i64: 16, 40>}, {pipeline_mode = #tpu.pipeline_mode<synchronous>, transform_indices = @transform_9, window_bounds = array<i64: 16, 1>}, {pipeline_mode = #tpu.pipeline_mode<synchronous>, transform_indices = @transform_10, window_bounds = array<i64: 32, 16>}]} {
    %c0 = arith.constant 0 : index
    %c0_0 = arith.constant 0 : index
    %0 = vector.load %arg2[%c0, %c0_0] : memref<32x16xbf16, #tpu.memory_space<vmem>>, vector<32x16xbf16>
    %c0_1 = arith.constant 0 : index
    %c0_2 = arith.constant 0 : index
    %1 = vector.load %arg1[%c0_1, %c0_2] : memref<8x32xf32, #tpu.memory_space<vmem>>, vector<8x32xf32>
    %c0_3 = arith.constant 0 : index
    %c0_4 = arith.constant 0 : index
    %2 = vector.load %arg3[%c0_3, %c0_4] : memref<8x24xbf16, #tpu.memory_space<vmem>>, vector<8x24xbf16>
    %c0_5 = arith.constant 0 : index
    %c0_6 = arith.constant 0 : index
    %3 = vector.load %arg4[%c0_5, %c0_6] : memref<8x1xf32, #tpu.memory_space<vmem>>, vector<8x1xf32>
    %cst = arith.constant 0.000000e+00 : f32
    %4 = vector.broadcast %cst : f32 to vector<16x128xf32>
    %c0_7 = arith.constant 0 : index
    %c0_8 = arith.constant 0 : index
    %5 = vector.load %arg12[%c0_7, %c0_8] : memref<16x128xf32, #tpu.memory_space<vmem>>, vector<16x128xf32>
    tpu.vector_store %arg12[%c0_7, %c0_8], %4 {strides = array<i32>} : memref<16x128xf32, #tpu.memory_space<vmem>>, vector<16x128xf32>,
    %c0_9 = arith.constant 0 : index
    %c1 = arith.constant 1 : index
    %6 = vector.load %arg12[%c0_9, %c1] : memref<16x128xf32, #tpu.memory_space<vmem>>, vector<8x32xf32>
    tpu.vector_store %arg12[%c0_9, %c1], %1 {strides = array<i32>} : memref<16x128xf32, #tpu.memory_space<vmem>>, vector<8x32xf32>,
    %7 = tpu.iota {dimensions = array<i32: 1>} : vector<1x32xi32>
    %c16_i32 = arith.constant 16 : i32
    %c0_i32 = arith.constant 0 : i32
    %8 = arith.cmpi eq, %c16_i32, %c0_i32 : i32
    %c1_i32 = arith.constant 1 : i32
    %9 = arith.select %8, %c1_i32, %c16_i32 : i32
    %10 = vector.broadcast %9 : i32 to vector<1x32xi32>
    %11 = arith.remsi %7, %10 : vector<1x32xi32>
    %c0_i32_10 = arith.constant 0 : i32
    %12 = vector.broadcast %c0_i32_10 : i32 to vector<1x32xi32>
    %13 = arith.cmpi ne, %11, %12 : vector<1x32xi32>
    %c0_i32_11 = arith.constant 0 : i32
    %14 = vector.broadcast %c0_i32_11 : i32 to vector<1x32xi32>
    %15 = arith.cmpi slt, %11, %14 : vector<1x32xi32>
    %c0_i32_12 = arith.constant 0 : i32
    %16 = arith.cmpi slt, %9, %c0_i32_12 : i32
    %17 = vector.broadcast %16 : i1 to vector<1x32xi1>
    %18 = vector.broadcast %17 : vector<1x32xi1> to vector<1x32xi1>
    %19 = arith.xori %15, %18 : vector<1x32xi1>
    %20 = arith.andi %19, %13 : vector<1x32xi1>
    %21 = vector.broadcast %9 : i32 to vector<1x32xi32>
    %22 = arith.addi %11, %21 : vector<1x32xi32>
    %23 = arith.select %20, %22, %11 : vector<1x32xi1>, vector<1x32xi32>
    %c0_13 = arith.constant 0 : index
    %c0_14 = arith.constant 0 : index
    %24 = vector.load %arg12[%c0_13, %c0_14] : memref<16x128xf32, #tpu.memory_space<vmem>>, vector<8x32xf32>
    %c-1_i32 = arith.constant -1 : i32
    %25 = vector.broadcast %c-1_i32 : i32 to vector<1x32xi32>
    %26 = arith.addi %23, %25 : vector<1x32xi32>
    %c0_i32_15 = arith.constant 0 : i32
    %27 = vector.broadcast %c0_i32_15 : i32 to vector<1x32xi32>
    %28 = arith.cmpi sge, %26, %27 : vector<1x32xi32>
    %c-1_i32_16 = arith.constant -1 : i32
    %29 = vector.broadcast %c-1_i32_16 : i32 to vector<1x32xi32>
    %30 = arith.addi %23, %29 : vector<1x32xi32>
    %c16_i32_17 = arith.constant 16 : i32
    %31 = vector.broadcast %c16_i32_17 : i32 to vector<1x32xi32>
    %32 = arith.cmpi slt, %30, %31 : vector<1x32xi32>
    %33 = arith.andi %28, %32 : vector<1x32xi1>
    %34 = arith.extui %33 : vector<1x32xi1> to vector<1x32xi32>
    %35 = arith.sitofp %34 : vector<1x32xi32> to vector<1x32xf32>
    %36 = vector.broadcast %35 : vector<1x32xf32> to vector<8x32xf32>
    %37 = arith.mulf %24, %36 : vector<8x32xf32>
    %c0_18 = arith.constant 0 : index
    %c0_19 = arith.constant 0 : index
    %38 = vector.load %arg13[%c0_18, %c0_19] : memref<40x128xf32, #tpu.memory_space<vmem>>, vector<8x32xf32>
    tpu.vector_store %arg13[%c0_18, %c0_19], %37 {strides = array<i32>} : memref<40x128xf32, #tpu.memory_space<vmem>>, vector<8x32xf32>,
    %c0_20 = arith.constant 0 : index
    %c1_21 = arith.constant 1 : index
    %39 = vector.load %arg12[%c0_20, %c1_21] : memref<16x128xf32, #tpu.memory_space<vmem>>, vector<8x32xf32>
    %c0_i32_22 = arith.constant 0 : i32
    %40 = vector.broadcast %c0_i32_22 : i32 to vector<1x32xi32>
    %41 = arith.addi %23, %40 : vector<1x32xi32>
    %c0_i32_23 = arith.constant 0 : i32
    %42 = vector.broadcast %c0_i32_23 : i32 to vector<1x32xi32>
    %43 = arith.cmpi sge, %41, %42 : vector<1x32xi32>
    %c0_i32_24 = arith.constant 0 : i32
    %44 = vector.broadcast %c0_i32_24 : i32 to vector<1x32xi32>
    %45 = arith.addi %23, %44 : vector<1x32xi32>
    %c16_i32_25 = arith.constant 16 : i32
    %46 = vector.broadcast %c16_i32_25 : i32 to vector<1x32xi32>
    %47 = arith.cmpi slt, %45, %46 : vector<1x32xi32>
    %48 = arith.andi %43, %47 : vector<1x32xi1>
    %49 = arith.extui %48 : vector<1x32xi1> to vector<1x32xi32>
    %50 = arith.sitofp %49 : vector<1x32xi32> to vector<1x32xf32>
    %51 = vector.broadcast %50 : vector<1x32xf32> to vector<8x32xf32>
    %52 = arith.mulf %39, %51 : vector<8x32xf32>
    %c8 = arith.constant 8 : index
    %c0_26 = arith.constant 0 : index
    %53 = vector.load %arg13[%c8, %c0_26] : memref<40x128xf32, #tpu.memory_space<vmem>>, vector<8x32xf32>
    tpu.vector_store %arg13[%c8, %c0_26], %52 {strides = array<i32>} : memref<40x128xf32, #tpu.memory_space<vmem>>, vector<8x32xf32>,
    %c0_27 = arith.constant 0 : index
    %c2 = arith.constant 2 : index
    %54 = vector.load %arg12[%c0_27, %c2] : memref<16x128xf32, #tpu.memory_space<vmem>>, vector<8x32xf32>
    %c1_i32_28 = arith.constant 1 : i32
    %55 = vector.broadcast %c1_i32_28 : i32 to vector<1x32xi32>
    %56 = arith.addi %23, %55 : vector<1x32xi32>
    %c0_i32_29 = arith.constant 0 : i32
    %57 = vector.broadcast %c0_i32_29 : i32 to vector<1x32xi32>
    %58 = arith.cmpi sge, %56, %57 : vector<1x32xi32>
    %c1_i32_30 = arith.constant 1 : i32
    %59 = vector.broadcast %c1_i32_30 : i32 to vector<1x32xi32>
    %60 = arith.addi %23, %59 : vector<1x32xi32>
    %c16_i32_31 = arith.constant 16 : i32
    %61 = vector.broadcast %c16_i32_31 : i32 to vector<1x32xi32>
    %62 = arith.cmpi slt, %60, %61 : vector<1x32xi32>
    %63 = arith.andi %58, %62 : vector<1x32xi1>
    %64 = arith.extui %63 : vector<1x32xi1> to vector<1x32xi32>
    %65 = arith.sitofp %64 : vector<1x32xi32> to vector<1x32xf32>
    %66 = vector.broadcast %65 : vector<1x32xf32> to vector<8x32xf32>
    %67 = arith.mulf %54, %66 : vector<8x32xf32>
    %c16 = arith.constant 16 : index
    %c0_32 = arith.constant 0 : index
    %68 = vector.load %arg13[%c16, %c0_32] : memref<40x128xf32, #tpu.memory_space<vmem>>, vector<8x32xf32>
    tpu.vector_store %arg13[%c16, %c0_32], %67 {strides = array<i32>} : memref<40x128xf32, #tpu.memory_space<vmem>>, vector<8x32xf32>,
    %c0_33 = arith.constant 0 : index
    %c0_34 = arith.constant 0 : index
    %69 = vector.load %arg13[%c0_33, %c0_34] : memref<40x128xf32, #tpu.memory_space<vmem>>, vector<24x32xf32>
    %70 = arith.truncf %69 : vector<24x32xf32> to vector<24x32xbf16>
    %cst_35 = arith.constant dense<0.000000e+00> : vector<8x32xf32>
    %71 = tpu.matmul %2, %70, %cst_35 {dimension_numbers = #tpu.dot_dimension_numbers<[1], [0], [0], [1], [0, 0, 1, 1], [], []>} : vector<8x24xbf16>, vector<24x32xbf16>, vector<8x32xf32> -> vector<8x32xf32>
    %72 = vector.broadcast %3 : vector<8x1xf32> to vector<8x32xf32>
    %73 = arith.addf %71, %72 : vector<8x32xf32>
    %cst_36 = arith.constant 0.000000e+00 : f32
    %74 = vector.broadcast %cst_36 : f32 to vector<16x128xf32>
    %c0_37 = arith.constant 0 : index
    %c0_38 = arith.constant 0 : index
    %75 = vector.load %arg12[%c0_37, %c0_38] : memref<16x128xf32, #tpu.memory_space<vmem>>, vector<16x128xf32>
    tpu.vector_store %arg12[%c0_37, %c0_38], %74 {strides = array<i32>} : memref<16x128xf32, #tpu.memory_space<vmem>>, vector<16x128xf32>,
    %c0_39 = arith.constant 0 : index
    %c0_40 = arith.constant 0 : index
    %76 = vector.load %arg12[%c0_39, %c0_40] : memref<16x128xf32, #tpu.memory_space<vmem>>, vector<8x32xf32>
    tpu.vector_store %arg12[%c0_39, %c0_40], %73 {strides = array<i32>} : memref<16x128xf32, #tpu.memory_space<vmem>>, vector<8x32xf32>,
    %c0_41 = arith.constant 0 : index
    %c1_42 = arith.constant 1 : index
    %77 = vector.load %arg12[%c0_41, %c1_42] : memref<16x128xf32, #tpu.memory_space<vmem>>, vector<8x32xf32>
    %78 = arith.maximumf %73, %77 : vector<8x32xf32>
    %79 = arith.truncf %78 : vector<8x32xf32> to vector<8x32xbf16>
    %cst_43 = arith.constant dense<0.000000e+00> : vector<8x16xf32>
    %80 = tpu.matmul %79, %0, %cst_43 {dimension_numbers = #tpu.dot_dimension_numbers<[1], [0], [0], [1], [0, 0, 1, 1], [], []>} : vector<8x32xbf16>, vector<32x16xbf16>, vector<8x16xf32> -> vector<8x16xf32>
    %c0_44 = arith.constant 0 : index
    %c0_45 = arith.constant 0 : index
    %81 = vector.load %arg5[%c0_44, %c0_45] : memref<16x24xbf16, #tpu.memory_space<vmem>>, vector<16x24xbf16>
    %c0_46 = arith.constant 0 : index
    %c0_47 = arith.constant 0 : index
    %82 = vector.load %arg6[%c0_46, %c0_47] : memref<16x1xf32, #tpu.memory_space<vmem>>, vector<16x1xf32>
    %cst_48 = arith.constant 0.000000e+00 : f32
    %83 = vector.broadcast %cst_48 : f32 to vector<16x128xf32>
    %c0_49 = arith.constant 0 : index
    %c0_50 = arith.constant 0 : index
    %84 = vector.load %arg12[%c0_49, %c0_50] : memref<16x128xf32, #tpu.memory_space<vmem>>, vector<16x128xf32>
    tpu.vector_store %arg12[%c0_49, %c0_50], %83 {strides = array<i32>} : memref<16x128xf32, #tpu.memory_space<vmem>>, vector<16x128xf32>,
    %c0_51 = arith.constant 0 : index
    %c1_52 = arith.constant 1 : index
    %85 = vector.load %arg12[%c0_51, %c1_52] : memref<16x128xf32, #tpu.memory_space<vmem>>, vector<8x16xf32>
    tpu.vector_store %arg12[%c0_51, %c1_52], %80 {strides = array<i32>} : memref<16x128xf32, #tpu.memory_space<vmem>>, vector<8x16xf32>,
    %86 = tpu.iota {dimensions = array<i32: 1>} : vector<1x16xi32>
    %c8_i32 = arith.constant 8 : i32
    %c0_i32_53 = arith.constant 0 : i32
    %87 = arith.cmpi eq, %c8_i32, %c0_i32_53 : i32
    %c1_i32_54 = arith.constant 1 : i32
    %88 = arith.select %87, %c1_i32_54, %c8_i32 : i32
    %89 = vector.broadcast %88 : i32 to vector<1x16xi32>
    %90 = arith.remsi %86, %89 : vector<1x16xi32>
    %c0_i32_55 = arith.constant 0 : i32
    %91 = vector.broadcast %c0_i32_55 : i32 to vector<1x16xi32>
    %92 = arith.cmpi ne, %90, %91 : vector<1x16xi32>
    %c0_i32_56 = arith.constant 0 : i32
    %93 = vector.broadcast %c0_i32_56 : i32 to vector<1x16xi32>
    %94 = arith.cmpi slt, %90, %93 : vector<1x16xi32>
    %c0_i32_57 = arith.constant 0 : i32
    %95 = arith.cmpi slt, %88, %c0_i32_57 : i32
    %96 = vector.broadcast %95 : i1 to vector<1x16xi1>
    %97 = vector.broadcast %96 : vector<1x16xi1> to vector<1x16xi1>
    %98 = arith.xori %94, %97 : vector<1x16xi1>
    %99 = arith.andi %98, %92 : vector<1x16xi1>
    %100 = vector.broadcast %88 : i32 to vector<1x16xi32>
    %101 = arith.addi %90, %100 : vector<1x16xi32>
    %102 = arith.select %99, %101, %90 : vector<1x16xi1>, vector<1x16xi32>
    %c0_58 = arith.constant 0 : index
    %c0_59 = arith.constant 0 : index
    %103 = vector.load %arg12[%c0_58, %c0_59] : memref<16x128xf32, #tpu.memory_space<vmem>>, vector<8x16xf32>
    %c-1_i32_60 = arith.constant -1 : i32
    %104 = vector.broadcast %c-1_i32_60 : i32 to vector<1x16xi32>
    %105 = arith.addi %102, %104 : vector<1x16xi32>
    %c0_i32_61 = arith.constant 0 : i32
    %106 = vector.broadcast %c0_i32_61 : i32 to vector<1x16xi32>
    %107 = arith.cmpi sge, %105, %106 : vector<1x16xi32>
    %c-1_i32_62 = arith.constant -1 : i32
    %108 = vector.broadcast %c-1_i32_62 : i32 to vector<1x16xi32>
    %109 = arith.addi %102, %108 : vector<1x16xi32>
    %c8_i32_63 = arith.constant 8 : i32
    %110 = vector.broadcast %c8_i32_63 : i32 to vector<1x16xi32>
    %111 = arith.cmpi slt, %109, %110 : vector<1x16xi32>
    %112 = arith.andi %107, %111 : vector<1x16xi1>
    %113 = arith.extui %112 : vector<1x16xi1> to vector<1x16xi32>
    %114 = arith.sitofp %113 : vector<1x16xi32> to vector<1x16xf32>
    %115 = vector.broadcast %114 : vector<1x16xf32> to vector<8x16xf32>
    %116 = arith.mulf %103, %115 : vector<8x16xf32>
    %c0_64 = arith.constant 0 : index
    %c0_65 = arith.constant 0 : index
    %117 = vector.load %arg13[%c0_64, %c0_65] : memref<40x128xf32, #tpu.memory_space<vmem>>, vector<8x16xf32>
    tpu.vector_store %arg13[%c0_64, %c0_65], %116 {strides = array<i32>} : memref<40x128xf32, #tpu.memory_space<vmem>>, vector<8x16xf32>,
    %c0_66 = arith.constant 0 : index
    %c1_67 = arith.constant 1 : index
    %118 = vector.load %arg12[%c0_66, %c1_67] : memref<16x128xf32, #tpu.memory_space<vmem>>, vector<8x16xf32>
    %c0_i32_68 = arith.constant 0 : i32
    %119 = vector.broadcast %c0_i32_68 : i32 to vector<1x16xi32>
    %120 = arith.addi %102, %119 : vector<1x16xi32>
    %c0_i32_69 = arith.constant 0 : i32
    %121 = vector.broadcast %c0_i32_69 : i32 to vector<1x16xi32>
    %122 = arith.cmpi sge, %120, %121 : vector<1x16xi32>
    %c0_i32_70 = arith.constant 0 : i32
    %123 = vector.broadcast %c0_i32_70 : i32 to vector<1x16xi32>
    %124 = arith.addi %102, %123 : vector<1x16xi32>
    %c8_i32_71 = arith.constant 8 : i32
    %125 = vector.broadcast %c8_i32_71 : i32 to vector<1x16xi32>
    %126 = arith.cmpi slt, %124, %125 : vector<1x16xi32>
    %127 = arith.andi %122, %126 : vector<1x16xi1>
    %128 = arith.extui %127 : vector<1x16xi1> to vector<1x16xi32>
    %129 = arith.sitofp %128 : vector<1x16xi32> to vector<1x16xf32>
    %130 = vector.broadcast %129 : vector<1x16xf32> to vector<8x16xf32>
    %131 = arith.mulf %118, %130 : vector<8x16xf32>
    %c8_72 = arith.constant 8 : index
    %c0_73 = arith.constant 0 : index
    %132 = vector.load %arg13[%c8_72, %c0_73] : memref<40x128xf32, #tpu.memory_space<vmem>>, vector<8x16xf32>
    tpu.vector_store %arg13[%c8_72, %c0_73], %131 {strides = array<i32>} : memref<40x128xf32, #tpu.memory_space<vmem>>, vector<8x16xf32>,
    %c0_74 = arith.constant 0 : index
    %c2_75 = arith.constant 2 : index
    %133 = vector.load %arg12[%c0_74, %c2_75] : memref<16x128xf32, #tpu.memory_space<vmem>>, vector<8x16xf32>
    %c1_i32_76 = arith.constant 1 : i32
    %134 = vector.broadcast %c1_i32_76 : i32 to vector<1x16xi32>
    %135 = arith.addi %102, %134 : vector<1x16xi32>
    %c0_i32_77 = arith.constant 0 : i32
    %136 = vector.broadcast %c0_i32_77 : i32 to vector<1x16xi32>
    %137 = arith.cmpi sge, %135, %136 : vector<1x16xi32>
    %c1_i32_78 = arith.constant 1 : i32
    %138 = vector.broadcast %c1_i32_78 : i32 to vector<1x16xi32>
    %139 = arith.addi %102, %138 : vector<1x16xi32>
    %c8_i32_79 = arith.constant 8 : i32
    %140 = vector.broadcast %c8_i32_79 : i32 to vector<1x16xi32>
    %141 = arith.cmpi slt, %139, %140 : vector<1x16xi32>
    %142 = arith.andi %137, %141 : vector<1x16xi1>
    %143 = arith.extui %142 : vector<1x16xi1> to vector<1x16xi32>
    %144 = arith.sitofp %143 : vector<1x16xi32> to vector<1x16xf32>
    %145 = vector.broadcast %144 : vector<1x16xf32> to vector<8x16xf32>
    %146 = arith.mulf %133, %145 : vector<8x16xf32>
    %c16_80 = arith.constant 16 : index
    %c0_81 = arith.constant 0 : index
    %147 = vector.load %arg13[%c16_80, %c0_81] : memref<40x128xf32, #tpu.memory_space<vmem>>, vector<8x16xf32>
    tpu.vector_store %arg13[%c16_80, %c0_81], %146 {strides = array<i32>} : memref<40x128xf32, #tpu.memory_space<vmem>>, vector<8x16xf32>,
    %c0_82 = arith.constant 0 : index
    %c0_83 = arith.constant 0 : index
    %148 = vector.load %arg13[%c0_82, %c0_83] : memref<40x128xf32, #tpu.memory_space<vmem>>, vector<24x16xf32>
    %149 = arith.truncf %148 : vector<24x16xf32> to vector<24x16xbf16>
    %cst_84 = arith.constant dense<0.000000e+00> : vector<16x16xf32>
    %150 = tpu.matmul %81, %149, %cst_84 {dimension_numbers = #tpu.dot_dimension_numbers<[1], [0], [0], [1], [0, 0, 1, 1], [], []>} : vector<16x24xbf16>, vector<24x16xbf16>, vector<16x16xf32> -> vector<16x16xf32>
    %151 = vector.broadcast %82 : vector<16x1xf32> to vector<16x16xf32>
    %152 = arith.addf %150, %151 : vector<16x16xf32>
    %c0_85 = arith.constant 0 : index
    %c0_86 = arith.constant 0 : index
    %153 = vector.load %arg11[%c0_85, %c0_86] : memref<32x16xf32, #tpu.memory_space<vmem>>, vector<16x16xf32>
    tpu.vector_store %arg11[%c0_85, %c0_86], %152 {strides = array<i32>} : memref<32x16xf32, #tpu.memory_space<vmem>>, vector<16x16xf32>,
    %c0_87 = arith.constant 0 : index
    %c0_88 = arith.constant 0 : index
    %154 = vector.load %arg7[%c0_87, %c0_88] : memref<8x40xbf16, #tpu.memory_space<vmem>>, vector<8x40xbf16>
    %c0_89 = arith.constant 0 : index
    %c0_90 = arith.constant 0 : index
    %155 = vector.load %arg8[%c0_89, %c0_90] : memref<8x1xf32, #tpu.memory_space<vmem>>, vector<8x1xf32>
    %cst_91 = arith.constant 0.000000e+00 : f32
    %156 = vector.broadcast %cst_91 : f32 to vector<16x128xf32>
    %c0_92 = arith.constant 0 : index
    %c0_93 = arith.constant 0 : index
    %157 = vector.load %arg12[%c0_92, %c0_93] : memref<16x128xf32, #tpu.memory_space<vmem>>, vector<16x128xf32>
    tpu.vector_store %arg12[%c0_92, %c0_93], %156 {strides = array<i32>} : memref<16x128xf32, #tpu.memory_space<vmem>>, vector<16x128xf32>,
    %c0_94 = arith.constant 0 : index
    %c2_95 = arith.constant 2 : index
    %158 = vector.load %arg12[%c0_94, %c2_95] : memref<16x128xf32, #tpu.memory_space<vmem>>, vector<8x32xf32>
    tpu.vector_store %arg12[%c0_94, %c2_95], %1 {strides = array<i32>} : memref<16x128xf32, #tpu.memory_space<vmem>>, vector<8x32xf32>,
    %159 = tpu.iota {dimensions = array<i32: 1>} : vector<1x32xi32>
    %c16_i32_96 = arith.constant 16 : i32
    %c0_i32_97 = arith.constant 0 : i32
    %160 = arith.cmpi eq, %c16_i32_96, %c0_i32_97 : i32
    %c1_i32_98 = arith.constant 1 : i32
    %161 = arith.select %160, %c1_i32_98, %c16_i32_96 : i32
    %162 = vector.broadcast %161 : i32 to vector<1x32xi32>
    %163 = arith.remsi %159, %162 : vector<1x32xi32>
    %c0_i32_99 = arith.constant 0 : i32
    %164 = vector.broadcast %c0_i32_99 : i32 to vector<1x32xi32>
    %165 = arith.cmpi ne, %163, %164 : vector<1x32xi32>
    %c0_i32_100 = arith.constant 0 : i32
    %166 = vector.broadcast %c0_i32_100 : i32 to vector<1x32xi32>
    %167 = arith.cmpi slt, %163, %166 : vector<1x32xi32>
    %c0_i32_101 = arith.constant 0 : i32
    %168 = arith.cmpi slt, %161, %c0_i32_101 : i32
    %169 = vector.broadcast %168 : i1 to vector<1x32xi1>
    %170 = vector.broadcast %169 : vector<1x32xi1> to vector<1x32xi1>
    %171 = arith.xori %167, %170 : vector<1x32xi1>
    %172 = arith.andi %171, %165 : vector<1x32xi1>
    %173 = vector.broadcast %161 : i32 to vector<1x32xi32>
    %174 = arith.addi %163, %173 : vector<1x32xi32>
    %175 = arith.select %172, %174, %163 : vector<1x32xi1>, vector<1x32xi32>
    %c0_102 = arith.constant 0 : index
    %c0_103 = arith.constant 0 : index
    %176 = vector.load %arg12[%c0_102, %c0_103] : memref<16x128xf32, #tpu.memory_space<vmem>>, vector<8x32xf32>
    %c-2_i32 = arith.constant -2 : i32
    %177 = vector.broadcast %c-2_i32 : i32 to vector<1x32xi32>
    %178 = arith.addi %175, %177 : vector<1x32xi32>
    %c0_i32_104 = arith.constant 0 : i32
    %179 = vector.broadcast %c0_i32_104 : i32 to vector<1x32xi32>
    %180 = arith.cmpi sge, %178, %179 : vector<1x32xi32>
    %c-2_i32_105 = arith.constant -2 : i32
    %181 = vector.broadcast %c-2_i32_105 : i32 to vector<1x32xi32>
    %182 = arith.addi %175, %181 : vector<1x32xi32>
    %c16_i32_106 = arith.constant 16 : i32
    %183 = vector.broadcast %c16_i32_106 : i32 to vector<1x32xi32>
    %184 = arith.cmpi slt, %182, %183 : vector<1x32xi32>
    %185 = arith.andi %180, %184 : vector<1x32xi1>
    %186 = arith.extui %185 : vector<1x32xi1> to vector<1x32xi32>
    %187 = arith.sitofp %186 : vector<1x32xi32> to vector<1x32xf32>
    %188 = vector.broadcast %187 : vector<1x32xf32> to vector<8x32xf32>
    %189 = arith.mulf %176, %188 : vector<8x32xf32>
    %c0_107 = arith.constant 0 : index
    %c0_108 = arith.constant 0 : index
    %190 = vector.load %arg13[%c0_107, %c0_108] : memref<40x128xf32, #tpu.memory_space<vmem>>, vector<8x32xf32>
    tpu.vector_store %arg13[%c0_107, %c0_108], %189 {strides = array<i32>} : memref<40x128xf32, #tpu.memory_space<vmem>>, vector<8x32xf32>,
    %c0_109 = arith.constant 0 : index
    %c1_110 = arith.constant 1 : index
    %191 = vector.load %arg12[%c0_109, %c1_110] : memref<16x128xf32, #tpu.memory_space<vmem>>, vector<8x32xf32>
    %c-1_i32_111 = arith.constant -1 : i32
    %192 = vector.broadcast %c-1_i32_111 : i32 to vector<1x32xi32>
    %193 = arith.addi %175, %192 : vector<1x32xi32>
    %c0_i32_112 = arith.constant 0 : i32
    %194 = vector.broadcast %c0_i32_112 : i32 to vector<1x32xi32>
    %195 = arith.cmpi sge, %193, %194 : vector<1x32xi32>
    %c-1_i32_113 = arith.constant -1 : i32
    %196 = vector.broadcast %c-1_i32_113 : i32 to vector<1x32xi32>
    %197 = arith.addi %175, %196 : vector<1x32xi32>
    %c16_i32_114 = arith.constant 16 : i32
    %198 = vector.broadcast %c16_i32_114 : i32 to vector<1x32xi32>
    %199 = arith.cmpi slt, %197, %198 : vector<1x32xi32>
    %200 = arith.andi %195, %199 : vector<1x32xi1>
    %201 = arith.extui %200 : vector<1x32xi1> to vector<1x32xi32>
    %202 = arith.sitofp %201 : vector<1x32xi32> to vector<1x32xf32>
    %203 = vector.broadcast %202 : vector<1x32xf32> to vector<8x32xf32>
    %204 = arith.mulf %191, %203 : vector<8x32xf32>
    %c8_115 = arith.constant 8 : index
    %c0_116 = arith.constant 0 : index
    %205 = vector.load %arg13[%c8_115, %c0_116] : memref<40x128xf32, #tpu.memory_space<vmem>>, vector<8x32xf32>
    tpu.vector_store %arg13[%c8_115, %c0_116], %204 {strides = array<i32>} : memref<40x128xf32, #tpu.memory_space<vmem>>, vector<8x32xf32>,
    %c0_117 = arith.constant 0 : index
    %c2_118 = arith.constant 2 : index
    %206 = vector.load %arg12[%c0_117, %c2_118] : memref<16x128xf32, #tpu.memory_space<vmem>>, vector<8x32xf32>
    %c0_i32_119 = arith.constant 0 : i32
    %207 = vector.broadcast %c0_i32_119 : i32 to vector<1x32xi32>
    %208 = arith.addi %175, %207 : vector<1x32xi32>
    %c0_i32_120 = arith.constant 0 : i32
    %209 = vector.broadcast %c0_i32_120 : i32 to vector<1x32xi32>
    %210 = arith.cmpi sge, %208, %209 : vector<1x32xi32>
    %c0_i32_121 = arith.constant 0 : i32
    %211 = vector.broadcast %c0_i32_121 : i32 to vector<1x32xi32>
    %212 = arith.addi %175, %211 : vector<1x32xi32>
    %c16_i32_122 = arith.constant 16 : i32
    %213 = vector.broadcast %c16_i32_122 : i32 to vector<1x32xi32>
    %214 = arith.cmpi slt, %212, %213 : vector<1x32xi32>
    %215 = arith.andi %210, %214 : vector<1x32xi1>
    %216 = arith.extui %215 : vector<1x32xi1> to vector<1x32xi32>
    %217 = arith.sitofp %216 : vector<1x32xi32> to vector<1x32xf32>
    %218 = vector.broadcast %217 : vector<1x32xf32> to vector<8x32xf32>
    %219 = arith.mulf %206, %218 : vector<8x32xf32>
    %c16_123 = arith.constant 16 : index
    %c0_124 = arith.constant 0 : index
    %220 = vector.load %arg13[%c16_123, %c0_124] : memref<40x128xf32, #tpu.memory_space<vmem>>, vector<8x32xf32>
    tpu.vector_store %arg13[%c16_123, %c0_124], %219 {strides = array<i32>} : memref<40x128xf32, #tpu.memory_space<vmem>>, vector<8x32xf32>,
    %c0_125 = arith.constant 0 : index
    %c3 = arith.constant 3 : index
    %221 = vector.load %arg12[%c0_125, %c3] : memref<16x128xf32, #tpu.memory_space<vmem>>, vector<8x32xf32>
    %c1_i32_126 = arith.constant 1 : i32
    %222 = vector.broadcast %c1_i32_126 : i32 to vector<1x32xi32>
    %223 = arith.addi %175, %222 : vector<1x32xi32>
    %c0_i32_127 = arith.constant 0 : i32
    %224 = vector.broadcast %c0_i32_127 : i32 to vector<1x32xi32>
    %225 = arith.cmpi sge, %223, %224 : vector<1x32xi32>
    %c1_i32_128 = arith.constant 1 : i32
    %226 = vector.broadcast %c1_i32_128 : i32 to vector<1x32xi32>
    %227 = arith.addi %175, %226 : vector<1x32xi32>
    %c16_i32_129 = arith.constant 16 : i32
    %228 = vector.broadcast %c16_i32_129 : i32 to vector<1x32xi32>
    %229 = arith.cmpi slt, %227, %228 : vector<1x32xi32>
    %230 = arith.andi %225, %229 : vector<1x32xi1>
    %231 = arith.extui %230 : vector<1x32xi1> to vector<1x32xi32>
    %232 = arith.sitofp %231 : vector<1x32xi32> to vector<1x32xf32>
    %233 = vector.broadcast %232 : vector<1x32xf32> to vector<8x32xf32>
    %234 = arith.mulf %221, %233 : vector<8x32xf32>
    %c24 = arith.constant 24 : index
    %c0_130 = arith.constant 0 : index
    %235 = vector.load %arg13[%c24, %c0_130] : memref<40x128xf32, #tpu.memory_space<vmem>>, vector<8x32xf32>
    tpu.vector_store %arg13[%c24, %c0_130], %234 {strides = array<i32>} : memref<40x128xf32, #tpu.memory_space<vmem>>, vector<8x32xf32>,
    %c0_131 = arith.constant 0 : index
    %c4 = arith.constant 4 : index
    %236 = vector.load %arg12[%c0_131, %c4] : memref<16x128xf32, #tpu.memory_space<vmem>>, vector<8x32xf32>
    %c2_i32 = arith.constant 2 : i32
    %237 = vector.broadcast %c2_i32 : i32 to vector<1x32xi32>
    %238 = arith.addi %175, %237 : vector<1x32xi32>
    %c0_i32_132 = arith.constant 0 : i32
    %239 = vector.broadcast %c0_i32_132 : i32 to vector<1x32xi32>
    %240 = arith.cmpi sge, %238, %239 : vector<1x32xi32>
    %c2_i32_133 = arith.constant 2 : i32
    %241 = vector.broadcast %c2_i32_133 : i32 to vector<1x32xi32>
    %242 = arith.addi %175, %241 : vector<1x32xi32>
    %c16_i32_134 = arith.constant 16 : i32
    %243 = vector.broadcast %c16_i32_134 : i32 to vector<1x32xi32>
    %244 = arith.cmpi slt, %242, %243 : vector<1x32xi32>
    %245 = arith.andi %240, %244 : vector<1x32xi1>
    %246 = arith.extui %245 : vector<1x32xi1> to vector<1x32xi32>
    %247 = arith.sitofp %246 : vector<1x32xi32> to vector<1x32xf32>
    %248 = vector.broadcast %247 : vector<1x32xf32> to vector<8x32xf32>
    %249 = arith.mulf %236, %248 : vector<8x32xf32>
    %c32 = arith.constant 32 : index
    %c0_135 = arith.constant 0 : index
    %250 = vector.load %arg13[%c32, %c0_135] : memref<40x128xf32, #tpu.memory_space<vmem>>, vector<8x32xf32>
    tpu.vector_store %arg13[%c32, %c0_135], %249 {strides = array<i32>} : memref<40x128xf32, #tpu.memory_space<vmem>>, vector<8x32xf32>,
    %c0_136 = arith.constant 0 : index
    %c0_137 = arith.constant 0 : index
    %251 = vector.load %arg13[%c0_136, %c0_137] : memref<40x128xf32, #tpu.memory_space<vmem>>, vector<40x32xf32>
    %252 = arith.truncf %251 : vector<40x32xf32> to vector<40x32xbf16>
    %cst_138 = arith.constant dense<0.000000e+00> : vector<8x32xf32>
    %253 = tpu.matmul %154, %252, %cst_138 {dimension_numbers = #tpu.dot_dimension_numbers<[1], [0], [0], [1], [0, 0, 1, 1], [], []>} : vector<8x40xbf16>, vector<40x32xbf16>, vector<8x32xf32> -> vector<8x32xf32>
    %254 = vector.broadcast %155 : vector<8x1xf32> to vector<8x32xf32>
    %255 = arith.addf %253, %254 : vector<8x32xf32>
    %cst_139 = arith.constant 0.000000e+00 : f32
    %256 = vector.broadcast %cst_139 : f32 to vector<16x128xf32>
    %c0_140 = arith.constant 0 : index
    %c0_141 = arith.constant 0 : index
    %257 = vector.load %arg12[%c0_140, %c0_141] : memref<16x128xf32, #tpu.memory_space<vmem>>, vector<16x128xf32>
    tpu.vector_store %arg12[%c0_140, %c0_141], %256 {strides = array<i32>} : memref<16x128xf32, #tpu.memory_space<vmem>>, vector<16x128xf32>,
    %c0_142 = arith.constant 0 : index
    %c0_143 = arith.constant 0 : index
    %258 = vector.load %arg12[%c0_142, %c0_143] : memref<16x128xf32, #tpu.memory_space<vmem>>, vector<8x32xf32>
    tpu.vector_store %arg12[%c0_142, %c0_143], %255 {strides = array<i32>} : memref<16x128xf32, #tpu.memory_space<vmem>>, vector<8x32xf32>,
    %c0_144 = arith.constant 0 : index
    %c1_145 = arith.constant 1 : index
    %259 = vector.load %arg12[%c0_144, %c1_145] : memref<16x128xf32, #tpu.memory_space<vmem>>, vector<8x32xf32>
    %260 = arith.maximumf %255, %259 : vector<8x32xf32>
    %261 = arith.truncf %260 : vector<8x32xf32> to vector<8x32xbf16>
    %cst_146 = arith.constant dense<0.000000e+00> : vector<8x16xf32>
    %262 = tpu.matmul %261, %0, %cst_146 {dimension_numbers = #tpu.dot_dimension_numbers<[1], [0], [0], [1], [0, 0, 1, 1], [], []>} : vector<8x32xbf16>, vector<32x16xbf16>, vector<8x16xf32> -> vector<8x16xf32>
    %c0_147 = arith.constant 0 : index
    %c0_148 = arith.constant 0 : index
    %263 = vector.load %arg9[%c0_147, %c0_148] : memref<16x40xbf16, #tpu.memory_space<vmem>>, vector<16x40xbf16>
    %c0_149 = arith.constant 0 : index
    %c0_150 = arith.constant 0 : index
    %264 = vector.load %arg10[%c0_149, %c0_150] : memref<16x1xf32, #tpu.memory_space<vmem>>, vector<16x1xf32>
    %cst_151 = arith.constant 0.000000e+00 : f32
    %265 = vector.broadcast %cst_151 : f32 to vector<16x128xf32>
    %c0_152 = arith.constant 0 : index
    %c0_153 = arith.constant 0 : index
    %266 = vector.load %arg12[%c0_152, %c0_153] : memref<16x128xf32, #tpu.memory_space<vmem>>, vector<16x128xf32>
    tpu.vector_store %arg12[%c0_152, %c0_153], %265 {strides = array<i32>} : memref<16x128xf32, #tpu.memory_space<vmem>>, vector<16x128xf32>,
    %c0_154 = arith.constant 0 : index
    %c2_155 = arith.constant 2 : index
    %267 = vector.load %arg12[%c0_154, %c2_155] : memref<16x128xf32, #tpu.memory_space<vmem>>, vector<8x16xf32>
    tpu.vector_store %arg12[%c0_154, %c2_155], %262 {strides = array<i32>} : memref<16x128xf32, #tpu.memory_space<vmem>>, vector<8x16xf32>,
    %268 = tpu.iota {dimensions = array<i32: 1>} : vector<1x16xi32>
    %c8_i32_156 = arith.constant 8 : i32
    %c0_i32_157 = arith.constant 0 : i32
    %269 = arith.cmpi eq, %c8_i32_156, %c0_i32_157 : i32
    %c1_i32_158 = arith.constant 1 : i32
    %270 = arith.select %269, %c1_i32_158, %c8_i32_156 : i32
    %271 = vector.broadcast %270 : i32 to vector<1x16xi32>
    %272 = arith.remsi %268, %271 : vector<1x16xi32>
    %c0_i32_159 = arith.constant 0 : i32
    %273 = vector.broadcast %c0_i32_159 : i32 to vector<1x16xi32>
    %274 = arith.cmpi ne, %272, %273 : vector<1x16xi32>
    %c0_i32_160 = arith.constant 0 : i32
    %275 = vector.broadcast %c0_i32_160 : i32 to vector<1x16xi32>
    %276 = arith.cmpi slt, %272, %275 : vector<1x16xi32>
    %c0_i32_161 = arith.constant 0 : i32
    %277 = arith.cmpi slt, %270, %c0_i32_161 : i32
    %278 = vector.broadcast %277 : i1 to vector<1x16xi1>
    %279 = vector.broadcast %278 : vector<1x16xi1> to vector<1x16xi1>
    %280 = arith.xori %276, %279 : vector<1x16xi1>
    %281 = arith.andi %280, %274 : vector<1x16xi1>
    %282 = vector.broadcast %270 : i32 to vector<1x16xi32>
    %283 = arith.addi %272, %282 : vector<1x16xi32>
    %284 = arith.select %281, %283, %272 : vector<1x16xi1>, vector<1x16xi32>
    %c0_162 = arith.constant 0 : index
    %c0_163 = arith.constant 0 : index
    %285 = vector.load %arg12[%c0_162, %c0_163] : memref<16x128xf32, #tpu.memory_space<vmem>>, vector<8x16xf32>
    %c-2_i32_164 = arith.constant -2 : i32
    %286 = vector.broadcast %c-2_i32_164 : i32 to vector<1x16xi32>
    %287 = arith.addi %284, %286 : vector<1x16xi32>
    %c0_i32_165 = arith.constant 0 : i32
    %288 = vector.broadcast %c0_i32_165 : i32 to vector<1x16xi32>
    %289 = arith.cmpi sge, %287, %288 : vector<1x16xi32>
    %c-2_i32_166 = arith.constant -2 : i32
    %290 = vector.broadcast %c-2_i32_166 : i32 to vector<1x16xi32>
    %291 = arith.addi %284, %290 : vector<1x16xi32>
    %c8_i32_167 = arith.constant 8 : i32
    %292 = vector.broadcast %c8_i32_167 : i32 to vector<1x16xi32>
    %293 = arith.cmpi slt, %291, %292 : vector<1x16xi32>
    %294 = arith.andi %289, %293 : vector<1x16xi1>
    %295 = arith.extui %294 : vector<1x16xi1> to vector<1x16xi32>
    %296 = arith.sitofp %295 : vector<1x16xi32> to vector<1x16xf32>
    %297 = vector.broadcast %296 : vector<1x16xf32> to vector<8x16xf32>
    %298 = arith.mulf %285, %297 : vector<8x16xf32>
    %c0_168 = arith.constant 0 : index
    %c0_169 = arith.constant 0 : index
    %299 = vector.load %arg13[%c0_168, %c0_169] : memref<40x128xf32, #tpu.memory_space<vmem>>, vector<8x16xf32>
    tpu.vector_store %arg13[%c0_168, %c0_169], %298 {strides = array<i32>} : memref<40x128xf32, #tpu.memory_space<vmem>>, vector<8x16xf32>,
    %c0_170 = arith.constant 0 : index
    %c1_171 = arith.constant 1 : index
    %300 = vector.load %arg12[%c0_170, %c1_171] : memref<16x128xf32, #tpu.memory_space<vmem>>, vector<8x16xf32>
    %c-1_i32_172 = arith.constant -1 : i32
    %301 = vector.broadcast %c-1_i32_172 : i32 to vector<1x16xi32>
    %302 = arith.addi %284, %301 : vector<1x16xi32>
    %c0_i32_173 = arith.constant 0 : i32
    %303 = vector.broadcast %c0_i32_173 : i32 to vector<1x16xi32>
    %304 = arith.cmpi sge, %302, %303 : vector<1x16xi32>
    %c-1_i32_174 = arith.constant -1 : i32
    %305 = vector.broadcast %c-1_i32_174 : i32 to vector<1x16xi32>
    %306 = arith.addi %284, %305 : vector<1x16xi32>
    %c8_i32_175 = arith.constant 8 : i32
    %307 = vector.broadcast %c8_i32_175 : i32 to vector<1x16xi32>
    %308 = arith.cmpi slt, %306, %307 : vector<1x16xi32>
    %309 = arith.andi %304, %308 : vector<1x16xi1>
    %310 = arith.extui %309 : vector<1x16xi1> to vector<1x16xi32>
    %311 = arith.sitofp %310 : vector<1x16xi32> to vector<1x16xf32>
    %312 = vector.broadcast %311 : vector<1x16xf32> to vector<8x16xf32>
    %313 = arith.mulf %300, %312 : vector<8x16xf32>
    %c8_176 = arith.constant 8 : index
    %c0_177 = arith.constant 0 : index
    %314 = vector.load %arg13[%c8_176, %c0_177] : memref<40x128xf32, #tpu.memory_space<vmem>>, vector<8x16xf32>
    tpu.vector_store %arg13[%c8_176, %c0_177], %313 {strides = array<i32>} : memref<40x128xf32, #tpu.memory_space<vmem>>, vector<8x16xf32>,
    %c0_178 = arith.constant 0 : index
    %c2_179 = arith.constant 2 : index
    %315 = vector.load %arg12[%c0_178, %c2_179] : memref<16x128xf32, #tpu.memory_space<vmem>>, vector<8x16xf32>
    %c0_i32_180 = arith.constant 0 : i32
    %316 = vector.broadcast %c0_i32_180 : i32 to vector<1x16xi32>
    %317 = arith.addi %284, %316 : vector<1x16xi32>
    %c0_i32_181 = arith.constant 0 : i32
    %318 = vector.broadcast %c0_i32_181 : i32 to vector<1x16xi32>
    %319 = arith.cmpi sge, %317, %318 : vector<1x16xi32>
    %c0_i32_182 = arith.constant 0 : i32
    %320 = vector.broadcast %c0_i32_182 : i32 to vector<1x16xi32>
    %321 = arith.addi %284, %320 : vector<1x16xi32>
    %c8_i32_183 = arith.constant 8 : i32
    %322 = vector.broadcast %c8_i32_183 : i32 to vector<1x16xi32>
    %323 = arith.cmpi slt, %321, %322 : vector<1x16xi32>
    %324 = arith.andi %319, %323 : vector<1x16xi1>
    %325 = arith.extui %324 : vector<1x16xi1> to vector<1x16xi32>
    %326 = arith.sitofp %325 : vector<1x16xi32> to vector<1x16xf32>
    %327 = vector.broadcast %326 : vector<1x16xf32> to vector<8x16xf32>
    %328 = arith.mulf %315, %327 : vector<8x16xf32>
    %c16_184 = arith.constant 16 : index
    %c0_185 = arith.constant 0 : index
    %329 = vector.load %arg13[%c16_184, %c0_185] : memref<40x128xf32, #tpu.memory_space<vmem>>, vector<8x16xf32>
    tpu.vector_store %arg13[%c16_184, %c0_185], %328 {strides = array<i32>} : memref<40x128xf32, #tpu.memory_space<vmem>>, vector<8x16xf32>,
    %c0_186 = arith.constant 0 : index
    %c3_187 = arith.constant 3 : index
    %330 = vector.load %arg12[%c0_186, %c3_187] : memref<16x128xf32, #tpu.memory_space<vmem>>, vector<8x16xf32>
    %c1_i32_188 = arith.constant 1 : i32
    %331 = vector.broadcast %c1_i32_188 : i32 to vector<1x16xi32>
    %332 = arith.addi %284, %331 : vector<1x16xi32>
    %c0_i32_189 = arith.constant 0 : i32
    %333 = vector.broadcast %c0_i32_189 : i32 to vector<1x16xi32>
    %334 = arith.cmpi sge, %332, %333 : vector<1x16xi32>
    %c1_i32_190 = arith.constant 1 : i32
    %335 = vector.broadcast %c1_i32_190 : i32 to vector<1x16xi32>
    %336 = arith.addi %284, %335 : vector<1x16xi32>
    %c8_i32_191 = arith.constant 8 : i32
    %337 = vector.broadcast %c8_i32_191 : i32 to vector<1x16xi32>
    %338 = arith.cmpi slt, %336, %337 : vector<1x16xi32>
    %339 = arith.andi %334, %338 : vector<1x16xi1>
    %340 = arith.extui %339 : vector<1x16xi1> to vector<1x16xi32>
    %341 = arith.sitofp %340 : vector<1x16xi32> to vector<1x16xf32>
    %342 = vector.broadcast %341 : vector<1x16xf32> to vector<8x16xf32>
    %343 = arith.mulf %330, %342 : vector<8x16xf32>
    %c24_192 = arith.constant 24 : index
    %c0_193 = arith.constant 0 : index
    %344 = vector.load %arg13[%c24_192, %c0_193] : memref<40x128xf32, #tpu.memory_space<vmem>>, vector<8x16xf32>
    tpu.vector_store %arg13[%c24_192, %c0_193], %343 {strides = array<i32>} : memref<40x128xf32, #tpu.memory_space<vmem>>, vector<8x16xf32>,
    %c0_194 = arith.constant 0 : index
    %c4_195 = arith.constant 4 : index
    %345 = vector.load %arg12[%c0_194, %c4_195] : memref<16x128xf32, #tpu.memory_space<vmem>>, vector<8x16xf32>
    %c2_i32_196 = arith.constant 2 : i32
    %346 = vector.broadcast %c2_i32_196 : i32 to vector<1x16xi32>
    %347 = arith.addi %284, %346 : vector<1x16xi32>
    %c0_i32_197 = arith.constant 0 : i32
    %348 = vector.broadcast %c0_i32_197 : i32 to vector<1x16xi32>
    %349 = arith.cmpi sge, %347, %348 : vector<1x16xi32>
    %c2_i32_198 = arith.constant 2 : i32
    %350 = vector.broadcast %c2_i32_198 : i32 to vector<1x16xi32>
    %351 = arith.addi %284, %350 : vector<1x16xi32>
    %c8_i32_199 = arith.constant 8 : i32
    %352 = vector.broadcast %c8_i32_199 : i32 to vector<1x16xi32>
    %353 = arith.cmpi slt, %351, %352 : vector<1x16xi32>
    %354 = arith.andi %349, %353 : vector<1x16xi1>
    %355 = arith.extui %354 : vector<1x16xi1> to vector<1x16xi32>
    %356 = arith.sitofp %355 : vector<1x16xi32> to vector<1x16xf32>
    %357 = vector.broadcast %356 : vector<1x16xf32> to vector<8x16xf32>
    %358 = arith.mulf %345, %357 : vector<8x16xf32>
    %c32_200 = arith.constant 32 : index
    %c0_201 = arith.constant 0 : index
    %359 = vector.load %arg13[%c32_200, %c0_201] : memref<40x128xf32, #tpu.memory_space<vmem>>, vector<8x16xf32>
    tpu.vector_store %arg13[%c32_200, %c0_201], %358 {strides = array<i32>} : memref<40x128xf32, #tpu.memory_space<vmem>>, vector<8x16xf32>,
    %c0_202 = arith.constant 0 : index
    %c0_203 = arith.constant 0 : index
    %360 = vector.load %arg13[%c0_202, %c0_203] : memref<40x128xf32, #tpu.memory_space<vmem>>, vector<40x16xf32>
    %361 = arith.truncf %360 : vector<40x16xf32> to vector<40x16xbf16>
    %cst_204 = arith.constant dense<0.000000e+00> : vector<16x16xf32>
    %362 = tpu.matmul %263, %361, %cst_204 {dimension_numbers = #tpu.dot_dimension_numbers<[1], [0], [0], [1], [0, 0, 1, 1], [], []>} : vector<16x40xbf16>, vector<40x16xbf16>, vector<16x16xf32> -> vector<16x16xf32>
    %363 = vector.broadcast %264 : vector<16x1xf32> to vector<16x16xf32>
    %364 = arith.addf %362, %363 : vector<16x16xf32>
    %c16_205 = arith.constant 16 : index
    %c0_206 = arith.constant 0 : index
    %365 = vector.load %arg11[%c16_205, %c0_206] : memref<32x16xf32, #tpu.memory_space<vmem>>, vector<16x16xf32>
    tpu.vector_store %arg11[%c16_205, %c0_206], %364 {strides = array<i32>} : memref<32x16xf32, #tpu.memory_space<vmem>>, vector<16x16xf32>,
    return
  }
  func.func @transform_0(%arg0: i32) -> (i32, i32) {
    %c0_i32 = arith.constant 0 : i32
    %c0_i32_0 = arith.constant 0 : i32
    %c0_i32_1 = arith.constant 0 : i32
    return %c0_i32, %c0_i32_0 : i32, i32
  }
  func.func @transform_1(%arg0: i32) -> (i32, i32) {
    %c0_i32 = arith.constant 0 : i32
    %c0_i32_0 = arith.constant 0 : i32
    %c0_i32_1 = arith.constant 0 : i32
    return %c0_i32, %c0_i32_0 : i32, i32
  }
  func.func @transform_2(%arg0: i32) -> (i32, i32) {
    %c0_i32 = arith.constant 0 : i32
    %c0_i32_0 = arith.constant 0 : i32
    %c0_i32_1 = arith.constant 0 : i32
    return %c0_i32, %c0_i32_0 : i32, i32
  }
  func.func @transform_3(%arg0: i32) -> (i32, i32) {
    %c0_i32 = arith.constant 0 : i32
    %c0_i32_0 = arith.constant 0 : i32
    %c0_i32_1 = arith.constant 0 : i32
    return %c0_i32, %c0_i32_0 : i32, i32
  }
  func.func @transform_4(%arg0: i32) -> (i32, i32) {
    %c0_i32 = arith.constant 0 : i32
    %c0_i32_0 = arith.constant 0 : i32
    %c0_i32_1 = arith.constant 0 : i32
    return %c0_i32, %c0_i32_0 : i32, i32
  }
  func.func @transform_5(%arg0: i32) -> (i32, i32) {
    %c0_i32 = arith.constant 0 : i32
    %c0_i32_0 = arith.constant 0 : i32
    %c0_i32_1 = arith.constant 0 : i32
    return %c0_i32, %c0_i32_0 : i32, i32
  }
  func.func @transform_6(%arg0: i32) -> (i32, i32) {
    %c0_i32 = arith.constant 0 : i32
    %c0_i32_0 = arith.constant 0 : i32
    %c0_i32_1 = arith.constant 0 : i32
    return %c0_i32, %c0_i32_0 : i32, i32
  }
  func.func @transform_7(%arg0: i32) -> (i32, i32) {
    %c0_i32 = arith.constant 0 : i32
    %c0_i32_0 = arith.constant 0 : i32
    %c0_i32_1 = arith.constant 0 : i32
    return %c0_i32, %c0_i32_0 : i32, i32
  }
  func.func @transform_8(%arg0: i32) -> (i32, i32) {
    %c0_i32 = arith.constant 0 : i32
    %c0_i32_0 = arith.constant 0 : i32
    %c0_i32_1 = arith.constant 0 : i32
    return %c0_i32, %c0_i32_0 : i32, i32
  }
  func.func @transform_9(%arg0: i32) -> (i32, i32) {
    %c0_i32 = arith.constant 0 : i32
    %c0_i32_0 = arith.constant 0 : i32
    %c0_i32_1 = arith.constant 0 : i32
    return %c0_i32, %c0_i32_0 : i32, i32
  }
  func.func @transform_10(%arg0: i32) -> (i32, i32) {
    %c0_i32 = arith.constant 0 : i32
    %c0_i32_0 = arith.constant 0 : i32
    %c0_i32_1 = arith.constant 0 : i32
    return %c0_i32, %c0_i32_0 : i32, i32
  }
}

</mosaic_0001>

<llo_original>
// kernel: prec_feature_extractor.1
$region0: #{prec_feature_extractor.1}
  #allocation0 [shape = 'u32[]', space=smem, size = 0x4, offset = 0x4, fixed_abs, tag = 'smem constant byte address 0x4 - core index']
  #allocation1 [shape = 'u32[144,128]{1,0:T(1,128)}', space=vmem, size = 0x12000, scoped, tag = 'internal scratch']
  #allocation2 [shape = 'f32[16,128]{1,0:T(8,128)}', space=vmem, size = 0x2000, scoped, tag = 'scratch operand']
  #allocation3 [shape = 'f32[40,128]{1,0:T(8,128)}', space=vmem, size = 0x5000, scoped, tag = 'scratch operand']
  %s0 = inlined_call_operand.vmem [shape: f32[8,32], index: 0, kind: input, shape index: {}]
  %s1 = inlined_call_operand.vmem [shape: bf16[32,16], index: 1, kind: input, shape index: {}]
  %s2 = inlined_call_operand.vmem [shape: bf16[8,24], index: 2, kind: input, shape index: {}]
  %s3 = inlined_call_operand.vmem [shape: f32[8,1], index: 3, kind: input, shape index: {}]
  %s4 = inlined_call_operand.vmem [shape: bf16[16,24], index: 4, kind: input, shape index: {}]
  %s5 = inlined_call_operand.vmem [shape: f32[16,1], index: 5, kind: input, shape index: {}]
  %s6 = inlined_call_operand.vmem [shape: bf16[8,40], index: 6, kind: input, shape index: {}]
  %s7 = inlined_call_operand.vmem [shape: f32[8,1], index: 7, kind: input, shape index: {}]
  %s8 = inlined_call_operand.vmem [shape: bf16[16,40], index: 8, kind: input, shape index: {}]
  %s9 = inlined_call_operand.vmem [shape: f32[16,1], index: 9, kind: input, shape index: {}]
  %s10 = inlined_call_operand.vmem [shape: f32[32,16], index: 10, kind: output, shape index: {}]
  %s11 = sld [smem:[#allocation0]]
  $region50: #{prec_feature_extractor.1} parent=0
    _
  %s13 = ssub.s32 1, %s11
  %s14 = scalar_select 0, %s13, %s11
  // Predicated region
  $region2: #{prec_feature_extractor.1} parent=0 // pred_check
    _
  $region3: #{prec_feature_extractor.1} parent=0 // pred_check_branch
    %16 = sbr.rel (0) target = $region5
  $region4: #{prec_feature_extractor.1} parent=0 // pred_region
    _
  $region5: #{prec_feature_extractor.1} parent=0 // pred_fallthru
    _
  // Predicated region
  $region6: #{prec_feature_extractor.1} parent=0 // pred_check
    _
  $region7: #{prec_feature_extractor.1} parent=0 // pred_check_branch
    %18 = sbr.rel (0) target = $region9
  $region8: #{prec_feature_extractor.1} parent=0 // pred_region
    _
  $region9: #{prec_feature_extractor.1} parent=0 // pred_fallthru
    _
  // Predicated region
  $region10: #{prec_feature_extractor.1} parent=0 // pred_check
    _
  $region11: #{prec_feature_extractor.1} parent=0 // pred_check_branch
    %20 = sbr.rel (0) target = $region13
  $region12: #{prec_feature_extractor.1} parent=0 // pred_region
    _
  $region13: #{prec_feature_extractor.1} parent=0 // pred_fallthru
    _
  // Predicated region
  $region14: #{prec_feature_extractor.1} parent=0 // pred_check
    _
  $region15: #{prec_feature_extractor.1} parent=0 // pred_check_branch
    %22 = sbr.rel (0) target = $region17
  $region16: #{prec_feature_extractor.1} parent=0 // pred_region
    _
  $region17: #{prec_feature_extractor.1} parent=0 // pred_fallthru
    _
  // Predicated region
  $region18: #{prec_feature_extractor.1} parent=0 // pred_check
    _
  $region19: #{prec_feature_extractor.1} parent=0 // pred_check_branch
    %24 = sbr.rel (0) target = $region21
  $region20: #{prec_feature_extractor.1} parent=0 // pred_region
    _
  $region21: #{prec_feature_extractor.1} parent=0 // pred_fallthru
    _
  // Predicated region
  $region22: #{prec_feature_extractor.1} parent=0 // pred_check
    _
  $region23: #{prec_feature_extractor.1} parent=0 // pred_check_branch
    %26 = sbr.rel (0) target = $region25
  $region24: #{prec_feature_extractor.1} parent=0 // pred_region
    _
  $region25: #{prec_feature_extractor.1} parent=0 // pred_fallthru
    _
  // Predicated region
  $region26: #{prec_feature_extractor.1} parent=0 // pred_check
    _
  $region27: #{prec_feature_extractor.1} parent=0 // pred_check_branch
    %28 = sbr.rel (0) target = $region29
  $region28: #{prec_feature_extractor.1} parent=0 // pred_region
    _
  $region29: #{prec_feature_extractor.1} parent=0 // pred_fallthru
    _
  // Predicated region
  $region30: #{prec_feature_extractor.1} parent=0 // pred_check
    _
  $region31: #{prec_feature_extractor.1} parent=0 // pred_check_branch
    %30 = sbr.rel (0) target = $region33
  $region32: #{prec_feature_extractor.1} parent=0 // pred_region
    _
  $region33: #{prec_feature_extractor.1} parent=0 // pred_fallthru
    _
  // Predicated region
  $region34: #{prec_feature_extractor.1} parent=0 // pred_check
    _
  $region35: #{prec_feature_extractor.1} parent=0 // pred_check_branch
    %32 = sbr.rel (0) target = $region37
  $region36: #{prec_feature_extractor.1} parent=0 // pred_region
    _
  $region37: #{prec_feature_extractor.1} parent=0 // pred_fallthru
    _
  // Predicated region
  $region38: #{prec_feature_extractor.1} parent=0 // pred_check
    _
  $region39: #{prec_feature_extractor.1} parent=0 // pred_check_branch
    %34 = sbr.rel (0) target = $region41
  $region40: #{prec_feature_extractor.1} parent=0 // pred_region
    _
  $region41: #{prec_feature_extractor.1} parent=0 // pred_fallthru
    _
  %v36 = vld [vmem:[%s1] sm:$0xf]
  %v37 = vld [vmem:[%s1 + $0x4] sm:$0xf]
  %v38 = vld [vmem:[%s1 + $0x8] sm:$0xf]
  %v39 = vld [vmem:[%s1 + $0xc] sm:$0xf]
  %v40 = vld [vmem:[%s0] sm:$0xff]
  %v41 = vld [vmem:[%s2] sm:$0xf]
  %v42 = vld [vmem:[%s3] sm:$0xff]
  %43 = vst [vmem:[#allocation2] sm:$0xff] 0.0
  %44 = vst [vmem:[#allocation2 + $0x8] sm:$0xff] 0.0
  %46 = vrot.lane.b32.xlu0 %v40, 1
  %v47 = vpop.permute.xlu0 %46
  %vm49 = vcmask 269320
  %50 = vst.msk [vmem:[#allocation2] sm:$0xff] %vm49, %v47
  %v51 = vlaneseq
  %v52 = vand.u32 %v51, 127
  %vm53 = vcmp.lt.s32.totalorder %v52, 0
  %v54 = vsub.s32 0, %v52
  %v55 = vsel %vm53, %v54, %v52
  %v56 = vshrl.u32 %v55, 4
  %v57 = vand.u32 %v55, 15
  %v58 = vsub.s32 0, %v57
  %v59 = vsel %vm53, %v58, %v57
  %vm60 = vcmp.ne.s32.totalorder %v59, 0
  %vm61 = vcmp.lt.s32.totalorder %v59, 0
  %vm62 = vmand %vm61, %vm60
  %v63 = vadd.s32 %v59, 16
  %v64 = vsel %vm62, %v63, %v59
  %v65 = vld [vmem:[#allocation2] sm:$0xff]
  %v66 = vadd.s32 %v64, 4294967295
  %vm67 = vcmp.ge.s32.totalorder %v66, 0
  %vm68 = vcmp.lt.s32.totalorder %v66, 16
  %vm69 = vmand %vm67, %vm68
  %v70 = vsel %vm69, 1, 0
  %v71 = vcvt.s32.f32 %v70
  %v72 = vmul.f32 %v65, %v71
  %vm73 = vcmask 261120
  %74 = vst.msk [vmem:[#allocation3] sm:$0xff] %vm73, %v72
  %v75 = vld [vmem:[#allocation2] sm:$0xff]
  %vm76 = vcmp.ge.s32.totalorder %v64, 0
  %vm77 = vcmp.lt.s32.totalorder %v64, 16
  %vm78 = vmand %vm76, %vm77
  %v79 = vsel %vm78, 1, 0
  %v80 = vcvt.s32.f32 %v79
  %82 = vrot.lane.b32.xlu0 %v80, 1
  %v83 = vpop.permute.xlu0 %82
  %v85 = vmul.f32 %v75, %v83
  %87 = vrot.lane.b32.xlu0 %v85, 127
  %v88 = vpop.permute.xlu0 %87
  %90 = vst.msk [vmem:[#allocation3 + $0x8] sm:$0xff] %vm73, %v88
  %v91 = vld [vmem:[#allocation2] sm:$0xff]
  %v92 = vadd.s32 %v64, 1
  %vm93 = vcmp.ge.s32.totalorder %v92, 0
  %vm94 = vcmp.lt.s32.totalorder %v92, 16
  %vm95 = vmand %vm93, %vm94
  %v96 = vsel %vm95, 1, 0
  %v97 = vcvt.s32.f32 %v96
  %99 = vrot.lane.b32.xlu0 %v97, 2
  %v100 = vpop.permute.xlu0 %99
  %v102 = vmul.f32 %v91, %v100
  %104 = vrot.lane.b32.xlu0 %v102, 126
  %v105 = vpop.permute.xlu0 %104
  %107 = vst.msk [vmem:[#allocation3 + $0x10] sm:$0xff] %vm73, %v105
  %v108 = vld [vmem:[#allocation3] sm:$0xff]
  %v109 = vld [vmem:[#allocation3 + $0x8] sm:$0xff]
  %v110 = vld [vmem:[#allocation3 + $0x10] sm:$0xff]
  %v111 = vpack.c.bf16 %v109, %v108
  %v112 = vpack.c.bf16 %v110, %v110
  %114 = vset.pattern.permute.xlu0 0
  %115 = vperm.xlu0 %114, %v42
  %v116 = vpop.permute.xlu0 %115
  %vm118 = vcmask 195584
  %v120 = vsel %vm118, %v41, 0
  %vm122 = vcmask 1043456
  %v124 = vsel %vm122, %v112, 0
  %126 = vmatprep.subr.bf16.mxu0 0
  %127 = vmatpush1.bf16.msra.mxu0 %v111
  %128 = vmatprep.subr.bf16.mxu0 0
  %129 = vmatpush1.bf16.msra.mxu0 %v124
  %130 = vmatprep.subr.bf16.mxu0 0
  %131 = vmatpush1.bf16.msra.mxu0 0
  %132 = vmatprep.subr.bf16.mxu0 0
  %133 = vmatpush1.bf16.msra.mxu0 0
  %134 = vmatprep.subr.bf16.mxu0 0
  %135 = vmatpush1.bf16.msra.mxu0 0
  %136 = vmatprep.subr.bf16.mxu0 0
  %137 = vmatpush1.bf16.msra.mxu0 0
  %138 = vmatprep.subr.bf16.mxu0 0
  %139 = vmatpush1.bf16.msra.mxu0 0
  %140 = vmatprep.subr.bf16.mxu0 0
  %141 = vmatpush1.bf16.msra.mxu0 0
  %142 = vmatprep.subr.bf16.mxu0 0
  %143 = vmatpush1.bf16.msra.mxu0 0
  %144 = vmatprep.subr.bf16.mxu0 0
  %145 = vmatpush1.bf16.msra.mxu0 0
  %146 = vmatprep.subr.bf16.mxu0 0
  %147 = vmatpush1.bf16.msra.mxu0 0
  %148 = vmatprep.subr.bf16.mxu0 0
  %149 = vmatpush1.bf16.msra.mxu0 0
  %150 = vmatprep.subr.bf16.mxu0 0
  %151 = vmatpush1.bf16.msra.mxu0 0
  %152 = vmatprep.subr.bf16.mxu0 0
  %153 = vmatpush1.bf16.msra.mxu0 0
  %154 = vmatprep.subr.bf16.mxu0 0
  %155 = vmatpush1.bf16.msra.mxu0 0
  %156 = vmatprep.subr.bf16.mxu0 0
  %157 = vmatpush1.bf16.msra.mxu0 0
  %158 = vmatprep.mubr.bf16.mxu0 0
  %159 = vmatmul.mubr.bf16.gmra.mrb[0].mxu0 %v120
  %v160 = vpop.f32.mrb[0].mxu0
  %v161 = vadd.f32 %v116, %v160
  %v162 = vpop.f32.mrb[0].mxu0
  %v163 = vpop.f32.mrb[0].mxu0
  %v164 = vpop.f32.mrb[0].mxu0
  %165 = vdwg.mxu0
  %166 = vst [vmem:[#allocation2] sm:$0xff] 0.0
  %167 = vst [vmem:[#allocation2 + $0x8] sm:$0xff] 0.0
  %168 = vst.msk [vmem:[#allocation2] sm:$0xff] %vm73, %v161
  %v169 = vld [vmem:[#allocation2] sm:$0xff]
  %171 = vrot.lane.b32.xlu0 %v169, 127
  %v172 = vpop.permute.xlu0 %171
  %v174 = vmax.f32 %v161, %v172
  %v175 = vpack.c.bf16 %v174, %v174
  %v180 = vunpack.c.l.b16 %v36
  %v181 = vunpack.c.l.b16 %v37
  %v182 = vunpack.c.l.b16 %v38
  %v183 = vunpack.c.l.b16 %v39
  %v184 = vpack.c.b16 %v181, %v180
  %v185 = vpack.c.b16 %v183, %v182
  %v189 = vsel %vm73, %v175, 0
  %191 = vmatprep.subr.bf16.mxu0 0
  %192 = vmatpush1.bf16.msra.mxu0 %v184
  %193 = vmatprep.subr.bf16.mxu0 0
  %194 = vmatpush1.bf16.msra.mxu0 %v185
  %195 = vmatprep.subr.bf16.mxu0 0
  %196 = vmatpush1.bf16.msra.mxu0 0
  %197 = vmatprep.subr.bf16.mxu0 0
  %198 = vmatpush1.bf16.msra.mxu0 0
  %199 = vmatprep.subr.bf16.mxu0 0
  %200 = vmatpush1.bf16.msra.mxu0 0
  %201 = vmatprep.subr.bf16.mxu0 0
  %202 = vmatpush1.bf16.msra.mxu0 0
  %203 = vmatprep.subr.bf16.mxu0 0
  %204 = vmatpush1.bf16.msra.mxu0 0
  %205 = vmatprep.subr.bf16.mxu0 0
  %206 = vmatpush1.bf16.msra.mxu0 0
  %207 = vmatprep.subr.bf16.mxu0 0
  %208 = vmatpush1.bf16.msra.mxu0 0
  %209 = vmatprep.subr.bf16.mxu0 0
  %210 = vmatpush1.bf16.msra.mxu0 0
  %211 = vmatprep.subr.bf16.mxu0 0
  %212 = vmatpush1.bf16.msra.mxu0 0
  %213 = vmatprep.subr.bf16.mxu0 0
  %214 = vmatpush1.bf16.msra.mxu0 0
  %215 = vmatprep.subr.bf16.mxu0 0
  %216 = vmatpush1.bf16.msra.mxu0 0
  %217 = vmatprep.subr.bf16.mxu0 0
  %218 = vmatpush1.bf16.msra.mxu0 0
  %219 = vmatprep.subr.bf16.mxu0 0
  %220 = vmatpush1.bf16.msra.mxu0 0
  %221 = vmatprep.subr.bf16.mxu0 0
  %222 = vmatpush1.bf16.msra.mxu0 0
  %223 = vmatprep.mubr.bf16.mxu0 0
  %224 = vmatmul.mubr.bf16.gmra.mrb[0].mxu0 %v189
  %v225 = vpop.f32.mrb[0].mxu0
  %v226 = vadd.f32 0.0, %v225
  %v227 = vpop.f32.mrb[0].mxu0
  %v228 = vpop.f32.mrb[0].mxu0
  %v229 = vpop.f32.mrb[0].mxu0
  %230 = vdwg.mxu0
  %v231 = vld [vmem:[%s4] sm:$0xf]
  %v232 = vld [vmem:[%s4 + $0x4] sm:$0xf]
  %v233 = vld [vmem:[%s5] sm:$0xff]
  %v234 = vld [vmem:[%s5 + $0x8] sm:$0xff]
  %235 = vst [vmem:[#allocation2] sm:$0xff] 0.0
  %236 = vst [vmem:[#allocation2 + $0x8] sm:$0xff] 0.0
  %238 = vrot.lane.b32.xlu0 %v226, 1
  %v239 = vpop.permute.xlu0 %238
  %vm241 = vcmask 138248
  %242 = vst.msk [vmem:[#allocation2] sm:$0xff] %vm241, %v239
  %vm243 = vcmp.lt.s32.totalorder %v52, 0
  %v244 = vsub.s32 0, %v52
  %v245 = vsel %vm243, %v244, %v52
  %v246 = vshrl.u32 %v245, 3
  %v247 = vand.u32 %v245, 7
  %v248 = vsub.s32 0, %v247
  %v249 = vsel %vm243, %v248, %v247
  %vm250 = vcmp.ne.s32.totalorder %v249, 0
  %vm251 = vcmp.lt.s32.totalorder %v249, 0
  %vm252 = vmand %vm251, %vm250
  %v253 = vadd.s32 %v249, 8
  %v254 = vsel %vm252, %v253, %v249
  %v255 = vld [vmem:[#allocation2] sm:$0xff]
  %v256 = vadd.s32 %v254, 4294967295
  %vm257 = vcmp.ge.s32.totalorder %v256, 0
  %vm258 = vcmp.lt.s32.totalorder %v256, 8
  %vm259 = vmand %vm257, %vm258
  %v260 = vsel %vm259, 1, 0
  %v261 = vcvt.s32.f32 %v260
  %v262 = vmul.f32 %v255, %v261
  %vm263 = vcmask 130048
  %264 = vst.msk [vmem:[#allocation3] sm:$0xff] %vm263, %v262
  %v265 = vld [vmem:[#allocation2] sm:$0xff]
  %vm266 = vcmp.ge.s32.totalorder %v254, 0
  %vm267 = vcmp.lt.s32.totalorder %v254, 8
  %vm268 = vmand %vm266, %vm267
  %v269 = vsel %vm268, 1, 0
  %v270 = vcvt.s32.f32 %v269
  %272 = vrot.lane.b32.xlu0 %v270, 1
  %v273 = vpop.permute.xlu0 %272
  %v275 = vmul.f32 %v265, %v273
  %277 = vrot.lane.b32.xlu0 %v275, 127
  %v278 = vpop.permute.xlu0 %277
  %280 = vst.msk [vmem:[#allocation3 + $0x8] sm:$0xff] %vm263, %v278
  %v281 = vld [vmem:[#allocation2] sm:$0xff]
  %v282 = vadd.s32 %v254, 1
  %vm283 = vcmp.ge.s32.totalorder %v282, 0
  %vm284 = vcmp.lt.s32.totalorder %v282, 8
  %vm285 = vmand %vm283, %vm284
  %v286 = vsel %vm285, 1, 0
  %v287 = vcvt.s32.f32 %v286
  %289 = vrot.lane.b32.xlu0 %v287, 2
  %v290 = vpop.permute.xlu0 %289
  %v292 = vmul.f32 %v281, %v290
  %294 = vrot.lane.b32.xlu0 %v292, 126
  %v295 = vpop.permute.xlu0 %294
  %297 = vst.msk [vmem:[#allocation3 + $0x10] sm:$0xff] %vm263, %v295
  %v298 = vld [vmem:[#allocation3] sm:$0xff]
  %v299 = vld [vmem:[#allocation3 + $0x8] sm:$0xff]
  %v300 = vld [vmem:[#allocation3 + $0x10] sm:$0xff]
  %v301 = vpack.c.bf16 %v299, %v298
  %v302 = vpack.c.bf16 %v300, %v300
  %304 = vset.pattern.permute.xlu0 0
  %305 = vperm.xlu0 %304, %v233
  %v306 = vpop.permute.xlu0 %305
  %309 = vset.pattern.permute.xlu0 0
  %310 = vperm.xlu0 %309, %v234
  %v311 = vpop.permute.xlu0 %310
  %v315 = vunpack.c.l.b16 %v231
  %v316 = vunpack.c.l.b16 %v232
  %v317 = vpack.c.b16 %v316, %v315
  %v319 = vsel %vm118, %v317, 0
  %v322 = vsel %vm122, %v302, 0
  %324 = vmatprep.subr.bf16.mxu0 0
  %325 = vmatpush1.bf16.msra.mxu0 %v301
  %326 = vmatprep.subr.bf16.mxu0 0
  %327 = vmatpush1.bf16.msra.mxu0 %v322
  %328 = vmatprep.subr.bf16.mxu0 0
  %329 = vmatpush1.bf16.msra.mxu0 0
  %330 = vmatprep.subr.bf16.mxu0 0
  %331 = vmatpush1.bf16.msra.mxu0 0
  %332 = vmatprep.subr.bf16.mxu0 0
  %333 = vmatpush1.bf16.msra.mxu0 0
  %334 = vmatprep.subr.bf16.mxu0 0
  %335 = vmatpush1.bf16.msra.mxu0 0
  %336 = vmatprep.subr.bf16.mxu0 0
  %337 = vmatpush1.bf16.msra.mxu0 0
  %338 = vmatprep.subr.bf16.mxu0 0
  %339 = vmatpush1.bf16.msra.mxu0 0
  %340 = vmatprep.subr.bf16.mxu0 0
  %341 = vmatpush1.bf16.msra.mxu0 0
  %342 = vmatprep.subr.bf16.mxu0 0
  %343 = vmatpush1.bf16.msra.mxu0 0
  %344 = vmatprep.subr.bf16.mxu0 0
  %345 = vmatpush1.bf16.msra.mxu0 0
  %346 = vmatprep.subr.bf16.mxu0 0
  %347 = vmatpush1.bf16.msra.mxu0 0
  %348 = vmatprep.subr.bf16.mxu0 0
  %349 = vmatpush1.bf16.msra.mxu0 0
  %350 = vmatprep.subr.bf16.mxu0 0
  %351 = vmatpush1.bf16.msra.mxu0 0
  %352 = vmatprep.subr.bf16.mxu0 0
  %353 = vmatpush1.bf16.msra.mxu0 0
  %354 = vmatprep.subr.bf16.mxu0 0
  %355 = vmatpush1.bf16.msra.mxu0 0
  %356 = vmatprep.mubr.bf16.mxu0 0
  %357 = vmatmul.mubr.bf16.gmra.mrb[0].mxu0 %v319
  %v358 = vpop.f32.mrb[0].mxu0
  %v359 = vadd.f32 %v306, %v358
  %v360 = vpop.f32.mrb[0].mxu0
  %v361 = vpop.f32.mrb[0].mxu0
  %v362 = vadd.f32 %v311, %v361
  %v363 = vpop.f32.mrb[0].mxu0
  %364 = vdwg.mxu0
  %365 = vst.msk [vmem:[%s10] sm:$0xff] %vm263, %v359
  %366 = vst.msk [vmem:[%s10 + $0x8] sm:$0xff] %vm263, %v362
  %v367 = vld [vmem:[%s6] sm:$0xf]
  %v368 = vld [vmem:[%s7] sm:$0xff]
  %369 = vst [vmem:[#allocation2] sm:$0xff] 0.0
  %370 = vst [vmem:[#allocation2 + $0x8] sm:$0xff] 0.0
  %371 = vrot.lane.b32.xlu0 %v40, 2
  %v372 = vpop.permute.xlu0 %371
  %vm374 = vcmask 277520
  %375 = vst.msk [vmem:[#allocation2] sm:$0xff] %vm374, %v372
  %v376 = vld [vmem:[#allocation2] sm:$0xff]
  %v377 = vadd.s32 %v64, 4294967294
  %vm378 = vcmp.ge.s32.totalorder %v377, 0
  %vm379 = vcmp.lt.s32.totalorder %v377, 16
  %vm380 = vmand %vm378, %vm379
  %v381 = vsel %vm380, 1, 0
  %v382 = vcvt.s32.f32 %v381
  %v383 = vmul.f32 %v376, %v382
  %384 = vst.msk [vmem:[#allocation3] sm:$0xff] %vm73, %v383
  %v385 = vld [vmem:[#allocation2] sm:$0xff]
  %387 = vrot.lane.b32.xlu0 %v71, 1
  %v388 = vpop.permute.xlu0 %387
  %v390 = vmul.f32 %v385, %v388
  %392 = vrot.lane.b32.xlu0 %v390, 127
  %v393 = vpop.permute.xlu0 %392
  %395 = vst.msk [vmem:[#allocation3 + $0x8] sm:$0xff] %vm73, %v393
  %v396 = vld [vmem:[#allocation2] sm:$0xff]
  %397 = vrot.lane.b32.xlu0 %v80, 2
  %v398 = vpop.permute.xlu0 %397
  %v400 = vmul.f32 %v396, %v398
  %402 = vrot.lane.b32.xlu0 %v400, 126
  %v403 = vpop.permute.xlu0 %402
  %405 = vst.msk [vmem:[#allocation3 + $0x10] sm:$0xff] %vm73, %v403
  %v406 = vld [vmem:[#allocation2] sm:$0xff]
  %407 = vrot.lane.b32.xlu0 %v97, 3
  %v408 = vpop.permute.xlu0 %407
  %v410 = vmul.f32 %v406, %v408
  %412 = vrot.lane.b32.xlu0 %v410, 125
  %v413 = vpop.permute.xlu0 %412
  %415 = vst.msk [vmem:[#allocation3 + $0x18] sm:$0xff] %vm73, %v413
  %v416 = vld [vmem:[#allocation2] sm:$0xff]
  %v417 = vadd.s32 %v64, 2
  %vm418 = vcmp.ge.s32.totalorder %v417, 0
  %vm419 = vcmp.lt.s32.totalorder %v417, 16
  %vm420 = vmand %vm418, %vm419
  %v421 = vsel %vm420, 1, 0
  %v422 = vcvt.s32.f32 %v421
  %424 = vrot.lane.b32.xlu0 %v422, 4
  %v425 = vpop.permute.xlu0 %424
  %v427 = vmul.f32 %v416, %v425
  %429 = vrot.lane.b32.xlu0 %v427, 124
  %v430 = vpop.permute.xlu0 %429
  %432 = vst.msk [vmem:[#allocation3 + $0x20] sm:$0xff] %vm73, %v430
  %v433 = vld [vmem:[#allocation3] sm:$0xff]
  %v434 = vld [vmem:[#allocation3 + $0x8] sm:$0xff]
  %v435 = vld [vmem:[#allocation3 + $0x10] sm:$0xff]
  %v436 = vld [vmem:[#allocation3 + $0x18] sm:$0xff]
  %v437 = vld [vmem:[#allocation3 + $0x20] sm:$0xff]
  %v438 = vpack.c.bf16 %v434, %v433
  %v439 = vpack.c.bf16 %v436, %v435
  %v440 = vpack.c.bf16 %v437, %v437
  %442 = vset.pattern.permute.xlu0 0
  %443 = vperm.xlu0 %442, %v368
  %v444 = vpop.permute.xlu0 %443
  %vm446 = vcmask 326656
  %v448 = vsel %vm446, %v367, 0
  %v451 = vsel %vm122, %v440, 0
  %453 = vmatprep.subr.bf16.mxu0 0
  %454 = vmatpush1.bf16.msra.mxu0 %v438
  %455 = vmatprep.subr.bf16.mxu0 0
  %456 = vmatpush1.bf16.msra.mxu0 %v439
  %457 = vmatprep.subr.bf16.mxu0 0
  %458 = vmatpush1.bf16.msra.mxu0 %v451
  %459 = vmatprep.subr.bf16.mxu0 0
  %460 = vmatpush1.bf16.msra.mxu0 0
  %461 = vmatprep.subr.bf16.mxu0 0
  %462 = vmatpush1.bf16.msra.mxu0 0
  %463 = vmatprep.subr.bf16.mxu0 0
  %464 = vmatpush1.bf16.msra.mxu0 0
  %465 = vmatprep.subr.bf16.mxu0 0
  %466 = vmatpush1.bf16.msra.mxu0 0
  %467 = vmatprep.subr.bf16.mxu0 0
  %468 = vmatpush1.bf16.msra.mxu0 0
  %469 = vmatprep.subr.bf16.mxu0 0
  %470 = vmatpush1.bf16.msra.mxu0 0
  %471 = vmatprep.subr.bf16.mxu0 0
  %472 = vmatpush1.bf16.msra.mxu0 0
  %473 = vmatprep.subr.bf16.mxu0 0
  %474 = vmatpush1.bf16.msra.mxu0 0
  %475 = vmatprep.subr.bf16.mxu0 0
  %476 = vmatpush1.bf16.msra.mxu0 0
  %477 = vmatprep.subr.bf16.mxu0 0
  %478 = vmatpush1.bf16.msra.mxu0 0
  %479 = vmatprep.subr.bf16.mxu0 0
  %480 = vmatpush1.bf16.msra.mxu0 0
  %481 = vmatprep.subr.bf16.mxu0 0
  %482 = vmatpush1.bf16.msra.mxu0 0
  %483 = vmatprep.subr.bf16.mxu0 0
  %484 = vmatpush1.bf16.msra.mxu0 0
  %485 = vmatprep.mubr.bf16.mxu0 0
  %486 = vmatmul.mubr.bf16.gmra.mrb[0].mxu0 %v448
  %v487 = vpop.f32.mrb[0].mxu0
  %v488 = vadd.f32 %v444, %v487
  %v489 = vpop.f32.mrb[0].mxu0
  %v490 = vpop.f32.mrb[0].mxu0
  %v491 = vpop.f32.mrb[0].mxu0
  %492 = vdwg.mxu0
  %493 = vst [vmem:[#allocation2] sm:$0xff] 0.0
  %494 = vst [vmem:[#allocation2 + $0x8] sm:$0xff] 0.0
  %495 = vst.msk [vmem:[#allocation2] sm:$0xff] %vm73, %v488
  %v496 = vld [vmem:[#allocation2] sm:$0xff]
  %498 = vrot.lane.b32.xlu0 %v496, 127
  %v499 = vpop.permute.xlu0 %498
  %v501 = vmax.f32 %v488, %v499
  %v502 = vpack.c.bf16 %v501, %v501
  %v504 = vsel %vm73, %v502, 0
  %506 = vmatprep.subr.bf16.mxu0 0
  %507 = vmatpush1.bf16.msra.mxu0 %v184
  %508 = vmatprep.subr.bf16.mxu0 0
  %509 = vmatpush1.bf16.msra.mxu0 %v185
  %510 = vmatprep.subr.bf16.mxu0 0
  %511 = vmatpush1.bf16.msra.mxu0 0
  %512 = vmatprep.subr.bf16.mxu0 0
  %513 = vmatpush1.bf16.msra.mxu0 0
  %514 = vmatprep.subr.bf16.mxu0 0
  %515 = vmatpush1.bf16.msra.mxu0 0
  %516 = vmatprep.subr.bf16.mxu0 0
  %517 = vmatpush1.bf16.msra.mxu0 0
  %518 = vmatprep.subr.bf16.mxu0 0
  %519 = vmatpush1.bf16.msra.mxu0 0
  %520 = vmatprep.subr.bf16.mxu0 0
  %521 = vmatpush1.bf16.msra.mxu0 0
  %522 = vmatprep.subr.bf16.mxu0 0
  %523 = vmatpush1.bf16.msra.mxu0 0
  %524 = vmatprep.subr.bf16.mxu0 0
  %525 = vmatpush1.bf16.msra.mxu0 0
  %526 = vmatprep.subr.bf16.mxu0 0
  %527 = vmatpush1.bf16.msra.mxu0 0
  %528 = vmatprep.subr.bf16.mxu0 0
  %529 = vmatpush1.bf16.msra.mxu0 0
  %530 = vmatprep.subr.bf16.mxu0 0
  %531 = vmatpush1.bf16.msra.mxu0 0
  %532 = vmatprep.subr.bf16.mxu0 0
  %533 = vmatpush1.bf16.msra.mxu0 0
  %534 = vmatprep.subr.bf16.mxu0 0
  %535 = vmatpush1.bf16.msra.mxu0 0
  %536 = vmatprep.subr.bf16.mxu0 0
  %537 = vmatpush1.bf16.msra.mxu0 0
  %538 = vmatprep.mubr.bf16.mxu0 0
  %539 = vmatmul.mubr.bf16.gmra.mrb[0].mxu0 %v504
  %v540 = vpop.f32.mrb[0].mxu0
  %v541 = vadd.f32 0.0, %v540
  %v542 = vpop.f32.mrb[0].mxu0
  %v543 = vpop.f32.mrb[0].mxu0
  %v544 = vpop.f32.mrb[0].mxu0
  %545 = vdwg.mxu0
  %v546 = vld [vmem:[%s8] sm:$0xf]
  %v547 = vld [vmem:[%s8 + $0x4] sm:$0xf]
  %v548 = vld [vmem:[%s9] sm:$0xff]
  %v549 = vld [vmem:[%s9 + $0x8] sm:$0xff]
  %550 = vst [vmem:[#allocation2] sm:$0xff] 0.0
  %551 = vst [vmem:[#allocation2 + $0x8] sm:$0xff] 0.0
  %553 = vrot.lane.b32.xlu0 %v541, 2
  %v554 = vpop.permute.xlu0 %553
  %vm556 = vcmask 146448
  %557 = vst.msk [vmem:[#allocation2] sm:$0xff] %vm556, %v554
  %v558 = vld [vmem:[#allocation2] sm:$0xff]
  %v559 = vadd.s32 %v254, 4294967294
  %vm560 = vcmp.ge.s32.totalorder %v559, 0
  %vm561 = vcmp.lt.s32.totalorder %v559, 8
  %vm562 = vmand %vm560, %vm561
  %v563 = vsel %vm562, 1, 0
  %v564 = vcvt.s32.f32 %v563
  %v565 = vmul.f32 %v558, %v564
  %566 = vst.msk [vmem:[#allocation3] sm:$0xff] %vm263, %v565
  %v567 = vld [vmem:[#allocation2] sm:$0xff]
  %569 = vrot.lane.b32.xlu0 %v261, 1
  %v570 = vpop.permute.xlu0 %569
  %v572 = vmul.f32 %v567, %v570
  %574 = vrot.lane.b32.xlu0 %v572, 127
  %v575 = vpop.permute.xlu0 %574
  %577 = vst.msk [vmem:[#allocation3 + $0x8] sm:$0xff] %vm263, %v575
  %v578 = vld [vmem:[#allocation2] sm:$0xff]
  %579 = vrot.lane.b32.xlu0 %v270, 2
  %v580 = vpop.permute.xlu0 %579
  %v582 = vmul.f32 %v578, %v580
  %584 = vrot.lane.b32.xlu0 %v582, 126
  %v585 = vpop.permute.xlu0 %584
  %587 = vst.msk [vmem:[#allocation3 + $0x10] sm:$0xff] %vm263, %v585
  %v588 = vld [vmem:[#allocation2] sm:$0xff]
  %589 = vrot.lane.b32.xlu0 %v287, 3
  %v590 = vpop.permute.xlu0 %589
  %v592 = vmul.f32 %v588, %v590
  %594 = vrot.lane.b32.xlu0 %v592, 125
  %v595 = vpop.permute.xlu0 %594
  %597 = vst.msk [vmem:[#allocation3 + $0x18] sm:$0xff] %vm263, %v595
  %v598 = vld [vmem:[#allocation2] sm:$0xff]
  %v599 = vadd.s32 %v254, 2
  %vm600 = vcmp.ge.s32.totalorder %v599, 0
  %vm601 = vcmp.lt.s32.totalorder %v599, 8
  %vm602 = vmand %vm600, %vm601
  %v603 = vsel %vm602, 1, 0
  %v604 = vcvt.s32.f32 %v603
  %606 = vrot.lane.b32.xlu0 %v604, 4
  %v607 = vpop.permute.xlu0 %606
  %v609 = vmul.f32 %v598, %v607
  %611 = vrot.lane.b32.xlu0 %v609, 124
  %v612 = vpop.permute.xlu0 %611
  %614 = vst.msk [vmem:[#allocation3 + $0x20] sm:$0xff] %vm263, %v612
  %v615 = vld [vmem:[#allocation3] sm:$0xff]
  %v616 = vld [vmem:[#allocation3 + $0x8] sm:$0xff]
  %v617 = vld [vmem:[#allocation3 + $0x10] sm:$0xff]
  %v618 = vld [vmem:[#allocation3 + $0x18] sm:$0xff]
  %v619 = vld [vmem:[#allocation3 + $0x20] sm:$0xff]
  %v620 = vpack.c.bf16 %v616, %v615
  %v621 = vpack.c.bf16 %v618, %v617
  %v622 = vpack.c.bf16 %v619, %v619
  %624 = vset.pattern.permute.xlu0 0
  %625 = vperm.xlu0 %624, %v548
  %v626 = vpop.permute.xlu0 %625
  %629 = vset.pattern.permute.xlu0 0
  %630 = vperm.xlu0 %629, %v549
  %v631 = vpop.permute.xlu0 %630
  %v635 = vunpack.c.l.b16 %v546
  %v636 = vunpack.c.l.b16 %v547
  %v637 = vpack.c.b16 %v636, %v635
  %v639 = vsel %vm446, %v637, 0
  %v642 = vsel %vm122, %v622, 0
  %644 = vmatprep.subr.bf16.mxu0 0
  %645 = vmatpush1.bf16.msra.mxu0 %v620
  %646 = vmatprep.subr.bf16.mxu0 0
  %647 = vmatpush1.bf16.msra.mxu0 %v621
  %648 = vmatprep.subr.bf16.mxu0 0
  %649 = vmatpush1.bf16.msra.mxu0 %v642
  %650 = vmatprep.subr.bf16.mxu0 0
  %651 = vmatpush1.bf16.msra.mxu0 0
  %652 = vmatprep.subr.bf16.mxu0 0
  %653 = vmatpush1.bf16.msra.mxu0 0
  %654 = vmatprep.subr.bf16.mxu0 0
  %655 = vmatpush1.bf16.msra.mxu0 0
  %656 = vmatprep.subr.bf16.mxu0 0
  %657 = vmatpush1.bf16.msra.mxu0 0
  %658 = vmatprep.subr.bf16.mxu0 0
  %659 = vmatpush1.bf16.msra.mxu0 0
  %660 = vmatprep.subr.bf16.mxu0 0
  %661 = vmatpush1.bf16.msra.mxu0 0
  %662 = vmatprep.subr.bf16.mxu0 0
  %663 = vmatpush1.bf16.msra.mxu0 0
  %664 = vmatprep.subr.bf16.mxu0 0
  %665 = vmatpush1.bf16.msra.mxu0 0
  %666 = vmatprep.subr.bf16.mxu0 0
  %667 = vmatpush1.bf16.msra.mxu0 0
  %668 = vmatprep.subr.bf16.mxu0 0
  %669 = vmatpush1.bf16.msra.mxu0 0
  %670 = vmatprep.subr.bf16.mxu0 0
  %671 = vmatpush1.bf16.msra.mxu0 0
  %672 = vmatprep.subr.bf16.mxu0 0
  %673 = vmatpush1.bf16.msra.mxu0 0
  %674 = vmatprep.subr.bf16.mxu0 0
  %675 = vmatpush1.bf16.msra.mxu0 0
  %676 = vmatprep.mubr.bf16.mxu0 0
  %677 = vmatmul.mubr.bf16.gmra.mrb[0].mxu0 %v639
  %v678 = vpop.f32.mrb[0].mxu0
  %v679 = vadd.f32 %v626, %v678
  %v680 = vpop.f32.mrb[0].mxu0
  %v681 = vpop.f32.mrb[0].mxu0
  %v682 = vadd.f32 %v631, %v681
  %v683 = vpop.f32.mrb[0].mxu0
  %684 = vdwg.mxu0
  %685 = vst.msk [vmem:[%s10 + $0x10] sm:$0xff] %vm263, %v679
  %686 = vst.msk [vmem:[%s10 + $0x18] sm:$0xff] %vm263, %v682
  // Predicated region
  $region42: #{prec_feature_extractor.1} parent=0 // pred_check
    _
  $region43: #{prec_feature_extractor.1} parent=0 // pred_check_branch
    %688 = sbr.rel (0) target = $region45
  $region44: #{prec_feature_extractor.1} parent=0 // pred_region
    _
  $region45: #{prec_feature_extractor.1} parent=0 // pred_fallthru
    _
  // Predicated region
  $region46: #{prec_feature_extractor.1} parent=0 // pred_check
    _
  $region47: #{prec_feature_extractor.1} parent=0 // pred_check_branch
    %690 = sbr.rel (0) target = $region49
  $region48: #{prec_feature_extractor.1} parent=0 // pred_region
    _
  $region49: #{prec_feature_extractor.1} parent=0 // pred_fallthru
    _

</llo_original>
